<compile_context>
chip_gen: v7x
topology: tpu7x:2x2x1
jax: 0.10.0
libtpu: 0.0.40
codegen_flags: <defaults>
</compile_context>

<pallas_src>
import functools

import jax
import jax.numpy as jnp
import numpy as np
from jax.experimental import pallas as pl
from jax.experimental.pallas import tpu as pltpu

IN_DIM = 32
MEM_DIM = 32


# ----------------------------------------------------------------------------
# Kernel: single invocation; in-kernel loop over tree levels (wavefront).
# ----------------------------------------------------------------------------
def _tree_kernel(child_ref,   # SMEM (depth*nmax*wmax,) int32: child state rows (sentinel -> zero row)
                 x_ref,       # VMEM (depth*wmax, IN_DIM): inputs laid out in (level, slot) order
                 wx_ref,      # VMEM (IN_DIM, 4*MEM)  = [Wioux | Wfx]
                 wh_ref,      # VMEM (MEM,    4*MEM)  = [Wiouh | Wfh]
                 b_ref,       # VMEM (1, 4*MEM)       = [bioux+biouh | bfx+bfh]
                 state_ref,   # VMEM out (n_rows, 2*MEM): row r = [c_r | h_r], resident
                 xw_ref,      # VMEM scratch (depth*wmax, 4*MEM): hoisted input-side matmul
                 gat_ref,     # VMEM scratch (nmax*wmax, 2*MEM): per-level child gather
                 *, depth, wmax, nmax, mem_dim):
    m = mem_dim

    # Zero the whole state table once: padding rows and the sentinel row must be
    # exact zeros (f * 0 == 0, sum of zero h == 0).  Keep this even if the
    # structure changes later -- cross-level reads rely on it.
    state_ref[...] = jnp.zeros_like(state_ref)

    # Hoisted input-side matmul for ALL nodes at once (independent of tree state,
    # so it does not belong on the sequential critical path).
    xw_ref[...] = (jnp.dot(x_ref[...], wx_ref[...],
                           preferred_element_type=jnp.float32) + b_ref[...])

    wh = wh_ref[...]   # keep the recurrent weight slab vreg/VMEM resident across levels

    for l in range(depth):                       # levels are the only serial dependency
        base = l * wmax

        # Gather child [c|h] rows of this level into scratch (child-major layout:
        # row k*wmax + slot).  Missing children point at the sentinel zero row.
        for idx in range(wmax * nmax):
            r = child_ref[l * wmax * nmax + idx]
            gat_ref[idx:idx + 1, :] = state_ref[pl.ds(r, 1), :]
        ch = gat_ref[...]                                    # (nmax*wmax, 2m)

        # One MXU push for the whole level: child_h_all @ [Wiouh | Wfh].
        hw = jnp.dot(ch[:, m:], wh,
                     preferred_element_type=jnp.float32)     # (nmax*wmax, 4m)
        xw = xw_ref[base:base + wmax, :]                     # (wmax, 4m)
        xf = xw[:, 3 * m:]

        # Child-sum reductions via static per-child slices (linear, so summing
        # after the matmul equals matmul of the summed h).
        iou_h = hw[0:wmax, :3 * m]
        fc = jax.nn.sigmoid(hw[0:wmax, 3 * m:] + xf) * ch[0:wmax, :m]
        for k in range(1, nmax):
            sl = slice(k * wmax, (k + 1) * wmax)
            iou_h = iou_h + hw[sl, :3 * m]
            fc = fc + jax.nn.sigmoid(hw[sl, 3 * m:] + xf) * ch[sl, :m]

        iou = xw[:, :3 * m] + iou_h
        io = jax.nn.sigmoid(iou[:, :2 * m])                  # i and o in one EUP pass
        i, o = io[:, :m], io[:, m:]
        u = jnp.tanh(iou[:, 2 * m:])

        c = i * u + fc                                       # (wmax, m)
        h = o * jnp.tanh(c)                                  # (wmax, m)

        # One full-tile store per level.  Padded slots write junk rows that are
        # never referenced (child table only points at real rows / sentinel).
        state_ref[base:base + wmax, :] = jnp.concatenate([c, h], axis=1)


# ----------------------------------------------------------------------------
# Host-side schedule construction (levels, slots, child-row table).
# ----------------------------------------------------------------------------
def _post_order(children_of, root):
    order, stack = [], [(root, False)]
    while stack:
        node, visited = stack.pop()
        if visited:
            order.append(node)
        else:
            stack.append((node, True))
            for ch in reversed(children_of[node]):
                stack.append((ch, False))
    return order


def _build_schedule(children_of, root):
    order = _post_order(children_of, root)
    level = {}
    for n in order:                               # post-order => children before parents
        chs = children_of[n]
        level[n] = 0 if not chs else 1 + max(level[c] for c in chs)
    depth = level[root] + 1
    nodes_by_level = [[] for _ in range(depth)]
    for n in order:
        nodes_by_level[level[n]].append(n)

    max_width = max(len(v) for v in nodes_by_level)
    nmax = max(1, max(len(children_of[n]) for n in order))
    wmax = max(8, ((max_width + 7) // 8) * 8)     # level width padded to sublane multiple
    n_x_rows = depth * wmax                       # (level, slot) row layout
    sentinel = n_x_rows                           # permanent zero row, never written
    n_rows = n_x_rows + 8                         # state table rows (multiple of 8)

    row_of = {}
    for l, nodes in enumerate(nodes_by_level):
        for j, n in enumerate(nodes):
            row_of[n] = l * wmax + j

    # Child table, child-major within a level: tbl[l, k, j] = state row of child k
    # of the node occupying slot j of level l (sentinel if missing / padded slot).
    child_tbl = np.full((depth, nmax, wmax), sentinel, dtype=np.int32)
    for l, nodes in enumerate(nodes_by_level):
        for j, n in enumerate(nodes):
            for k, ch_node in enumerate(children_of[n]):
                child_tbl[l, k, j] = row_of[ch_node]

    return row_of, child_tbl.reshape(-1), nmax, wmax, depth, n_rows, n_x_rows


def _pack_params(params):
    wx = jnp.concatenate([params["wioux"], params["wfx"]], axis=1)          # (IN, 4*MEM)
    wh = jnp.concatenate([params["wiouh"], params["wfh"]], axis=1)          # (MEM, 4*MEM)
    b = jnp.concatenate([params["bioux"] + params["biouh"],
                         params["bfx"] + params["bfh"]], axis=1)            # (1, 4*MEM)
    return wx, wh, b


def tree_lstm_forward(params, children_of, root, inputs):
    """Run the full Child-Sum TreeLSTM tree in one level-batched Pallas launch."""
    row_of, child_tbl, nmax, wmax, depth, n_rows, n_x_rows = _build_schedule(
        children_of, root)
    wx, wh, b = _pack_params(params)

    node_ids = np.array(sorted(row_of.keys()), dtype=np.int32)
    rows = np.array([row_of[int(n)] for n in node_ids], dtype=np.int32)
    x_table = (jnp.zeros((n_x_rows, IN_DIM), jnp.float32)
               .at[rows].set(jnp.asarray(inputs, jnp.float32)[node_ids]))

    kernel = functools.partial(_tree_kernel, depth=depth, wmax=wmax,
                               nmax=nmax, mem_dim=MEM_DIM)
    const = lambda i, child: (0, 0)   # everything VMEM-resident, DMA'd once

    grid_spec = pltpu.PrefetchScalarGridSpec(
        num_scalar_prefetch=1,
        grid=(1,),                                 # single step: loop lives in-kernel
        in_specs=[
            pl.BlockSpec((n_x_rows, IN_DIM), const),
            pl.BlockSpec((IN_DIM, 4 * MEM_DIM), const),
            pl.BlockSpec((MEM_DIM, 4 * MEM_DIM), const),
            pl.BlockSpec((1, 4 * MEM_DIM), const),
        ],
        out_specs=pl.BlockSpec((n_rows, 2 * MEM_DIM), const),
        scratch_shapes=[
            pltpu.VMEM((n_x_rows, 4 * MEM_DIM), jnp.float32),       # hoisted xw
            pltpu.VMEM((nmax * wmax, 2 * MEM_DIM), jnp.float32),    # child gather
        ],
    )

    flops = 2 * (n_x_rows * IN_DIM * 4 * MEM_DIM
                 + depth * nmax * wmax * MEM_DIM * 4 * MEM_DIM)
    transcendentals = depth * wmax * (3 + 2 * nmax) * MEM_DIM
    bytes_accessed = 4 * (x_table.size + wx.size + wh.size + b.size
                          + n_rows * 2 * MEM_DIM)

    states = pl.pallas_call(
        kernel,
        grid_spec=grid_spec,
        out_shape=jax.ShapeDtypeStruct((n_rows, 2 * MEM_DIM), jnp.float32),
        compiler_params=pltpu.CompilerParams(
            dimension_semantics=("arbitrary",)),
        cost_estimate=pl.CostEstimate(flops=flops,
                                      transcendentals=transcendentals,
                                      bytes_accessed=bytes_accessed),
    )(jnp.asarray(child_tbl, jnp.int32), x_table, wx, wh, b)

    root_row = states[row_of[root]]
    c = root_row[:MEM_DIM][None, :]
    h = root_row[MEM_DIM:][None, :]
    return c, h, states, row_of


# ----------------------------------------------------------------------------
# Pure-JAX reference (identical math to the PyTorch module).
# ----------------------------------------------------------------------------
def tree_lstm_reference(params, children_of, root, inputs):
    states = {}

    def cell(x, child_c, child_h):
        child_h_sum = jnp.sum(child_h, axis=0, keepdims=True)
        iou = (x @ params["wioux"] + params["bioux"]
               + child_h_sum @ params["wiouh"] + params["biouh"])
        i = jax.nn.sigmoid(iou[:, :MEM_DIM])
        o = jax.nn.sigmoid(iou[:, MEM_DIM:2 * MEM_DIM])
        u = jnp.tanh(iou[:, 2 * MEM_DIM:])
        f = jax.nn.sigmoid(child_h @ params["wfh"] + params["bfh"]
                           + x @ params["wfx"] + params["bfx"])
        c = i * u + jnp.sum(f * child_c, axis=0, keepdims=True)
        h = o * jnp.tanh(c)
        return c, h

    def rec(n):
        for ch in children_of[n]:
            rec(ch)
        if children_of[n]:
            cc = jnp.concatenate([states[ch][0] for ch in children_of[n]], axis=0)
            hh = jnp.concatenate([states[ch][1] for ch in children_of[n]], axis=0)
        else:
            cc = jnp.zeros((1, MEM_DIM), jnp.float32)
            hh = jnp.zeros((1, MEM_DIM), jnp.float32)
        states[n] = cell(inputs[n][None, :], cc, hh)
        return states[n]

    return rec(root)


def init_params(key):
    """Deterministic synthetic init (PyTorch nn.Linear-style uniform)."""
    def linear(k, fan_in, fan_out):
        kw, kb = jax.random.split(k)
        bound = 1.0 / np.sqrt(fan_in)
        w = jax.random.uniform(kw, (fan_in, fan_out), jnp.float32, -bound, bound)
        b = jax.random.uniform(kb, (1, fan_out), jnp.float32, -bound, bound)
        return w, b

    k1, k2, k3, k4 = jax.random.split(key, 4)
    wioux, bioux = linear(k1, IN_DIM, 3 * MEM_DIM)
    wiouh, biouh = linear(k2, MEM_DIM, 3 * MEM_DIM)
    wfx, bfx = linear(k3, IN_DIM, MEM_DIM)
    wfh, bfh = linear(k4, MEM_DIM, MEM_DIM)
    return dict(wioux=wioux, bioux=bioux, wiouh=wiouh, biouh=biouh,
                wfx=wfx, bfx=bfx, wfh=wfh, bfh=bfh)


if __name__ == "__main__":
    key = jax.random.PRNGKey(0)
    kp, kx = jax.random.split(key)
    params = init_params(kp)

    # Small deterministic tree over 7 tokens (includes a 3-child node):
    #            0
    #          / | \
    #         1  2  3
    #            |
    #           / \
    #          4   5
    #          |
    #          6
    children_of = {0: [1, 2, 3], 1: [], 2: [4, 5], 3: [], 4: [6], 5: [], 6: []}
    root = 0

    inputs = jax.random.normal(kx, (7, IN_DIM), jnp.float32)

    c, h, states, row_of = tree_lstm_forward(params, children_of, root, inputs)
    jax.block_until_ready((c, h, states))

    c_ref, h_ref = tree_lstm_reference(params, children_of, root, inputs)
    np.testing.assert_allclose(np.asarray(c), np.asarray(c_ref),
                               rtol=1e-5, atol=1e-5)
    np.testing.assert_allclose(np.asarray(h), np.asarray(h_ref),
                               rtol=1e-5, atol=1e-5)

    assert c.shape == (1, MEM_DIM) and h.shape == (1, MEM_DIM)
    print("KERNEL_OK")
</pallas_src>

<mosaic_0001>
module attributes {stable_mosaic.version = 11 : i64} {
  func.func @_tree_kernel(%arg0: i32, %arg1: memref<96xi32, #tpu.memory_space<smem>>, %arg2: memref<32x32xf32, #tpu.memory_space<vmem>>, %arg3: memref<32x128xf32, #tpu.memory_space<vmem>>, %arg4: memref<32x128xf32, #tpu.memory_space<vmem>>, %arg5: memref<1x128xf32, #tpu.memory_space<vmem>>, %arg6: memref<40x64xf32, #tpu.memory_space<vmem>>, %arg7: memref<32x128xf32, #tpu.memory_space<vmem>>, %arg8: memref<24x64xf32, #tpu.memory_space<vmem>>) attributes {dimension_semantics = [#tpu.dimension_semantics<arbitrary>], iteration_bounds = array<i64: 1>, scalar_prefetch = 1 : i64, scratch_operands = 2 : i64, tpu.core_type = #tpu.core_type<tc>, window_params = [{pipeline_mode = #tpu.pipeline_mode<synchronous>, transform_indices = @transform_0, window_bounds = array<i64: 32, 32>}, {pipeline_mode = #tpu.pipeline_mode<synchronous>, transform_indices = @transform_1, window_bounds = array<i64: 32, 128>}, {pipeline_mode = #tpu.pipeline_mode<synchronous>, transform_indices = @transform_2, window_bounds = array<i64: 32, 128>}, {pipeline_mode = #tpu.pipeline_mode<synchronous>, transform_indices = @transform_3, window_bounds = array<i64: 1, 128>}, {pipeline_mode = #tpu.pipeline_mode<synchronous>, transform_indices = @transform_4, window_bounds = array<i64: 40, 64>}]} {
    %cst = arith.constant 0.000000e+00 : f32
    %0 = vector.broadcast %cst : f32 to vector<40x64xf32>
    %c0 = arith.constant 0 : index
    %c0_0 = arith.constant 0 : index
    %1 = vector.load %arg6[%c0, %c0_0] : memref<40x64xf32, #tpu.memory_space<vmem>>, vector<40x64xf32>
    tpu.vector_store %arg6[%c0, %c0_0], %0 {strides = array<i32>} : memref<40x64xf32, #tpu.memory_space<vmem>>, vector<40x64xf32>,
    %c0_1 = arith.constant 0 : index
    %c0_2 = arith.constant 0 : index
    %2 = vector.load %arg2[%c0_1, %c0_2] : memref<32x32xf32, #tpu.memory_space<vmem>>, vector<32x32xf32>
    %c0_3 = arith.constant 0 : index
    %c0_4 = arith.constant 0 : index
    %3 = vector.load %arg3[%c0_3, %c0_4] : memref<32x128xf32, #tpu.memory_space<vmem>>, vector<32x128xf32>
    %cst_5 = arith.constant dense<0.000000e+00> : vector<32x128xf32>
    %4 = tpu.matmul %2, %3, %cst_5 {dimension_numbers = #tpu.dot_dimension_numbers<[1], [0], [0], [1], [0, 0, 1, 1], [], []>} : vector<32x32xf32>, vector<32x128xf32>, vector<32x128xf32> -> vector<32x128xf32>
    %c0_6 = arith.constant 0 : index
    %c0_7 = arith.constant 0 : index
    %5 = vector.load %arg5[%c0_6, %c0_7] : memref<1x128xf32, #tpu.memory_space<vmem>>, vector<1x128xf32>
    %6 = vector.broadcast %5 : vector<1x128xf32> to vector<32x128xf32>
    %7 = arith.addf %4, %6 : vector<32x128xf32>
    %c0_8 = arith.constant 0 : index
    %c0_9 = arith.constant 0 : index
    %8 = vector.load %arg7[%c0_8, %c0_9] : memref<32x128xf32, #tpu.memory_space<vmem>>, vector<32x128xf32>
    tpu.vector_store %arg7[%c0_8, %c0_9], %7 {strides = array<i32>} : memref<32x128xf32, #tpu.memory_space<vmem>>, vector<32x128xf32>,
    %c0_10 = arith.constant 0 : index
    %c0_11 = arith.constant 0 : index
    %9 = vector.load %arg4[%c0_10, %c0_11] : memref<32x128xf32, #tpu.memory_space<vmem>>, vector<32x128xf32>
    %c0_12 = arith.constant 0 : index
    %10 = memref.load %arg1[%c0_12] : memref<96xi32, #tpu.memory_space<smem>>
    %11 = arith.index_cast %10 : i32 to index
    %c0_13 = arith.constant 0 : index
    %12 = vector.load %arg6[%11, %c0_13] : memref<40x64xf32, #tpu.memory_space<vmem>>, vector<1x64xf32>
    %c0_14 = arith.constant 0 : index
    %c0_15 = arith.constant 0 : index
    %13 = vector.load %arg8[%c0_14, %c0_15] : memref<24x64xf32, #tpu.memory_space<vmem>>, vector<1x64xf32>
    tpu.vector_store %arg8[%c0_14, %c0_15], %12 {strides = array<i32>} : memref<24x64xf32, #tpu.memory_space<vmem>>, vector<1x64xf32>,
    %c1 = arith.constant 1 : index
    %14 = memref.load %arg1[%c1] : memref<96xi32, #tpu.memory_space<smem>>
    %15 = arith.index_cast %14 : i32 to index
    %c0_16 = arith.constant 0 : index
    %16 = vector.load %arg6[%15, %c0_16] : memref<40x64xf32, #tpu.memory_space<vmem>>, vector<1x64xf32>
    %c1_17 = arith.constant 1 : index
    %c0_18 = arith.constant 0 : index
    %17 = vector.load %arg8[%c1_17, %c0_18] : memref<24x64xf32, #tpu.memory_space<vmem>>, vector<1x64xf32>
    tpu.vector_store %arg8[%c1_17, %c0_18], %16 {strides = array<i32>} : memref<24x64xf32, #tpu.memory_space<vmem>>, vector<1x64xf32>,
    %c2 = arith.constant 2 : index
    %18 = memref.load %arg1[%c2] : memref<96xi32, #tpu.memory_space<smem>>
    %19 = arith.index_cast %18 : i32 to index
    %c0_19 = arith.constant 0 : index
    %20 = vector.load %arg6[%19, %c0_19] : memref<40x64xf32, #tpu.memory_space<vmem>>, vector<1x64xf32>
    %c2_20 = arith.constant 2 : index
    %c0_21 = arith.constant 0 : index
    %21 = vector.load %arg8[%c2_20, %c0_21] : memref<24x64xf32, #tpu.memory_space<vmem>>, vector<1x64xf32>
    tpu.vector_store %arg8[%c2_20, %c0_21], %20 {strides = array<i32>} : memref<24x64xf32, #tpu.memory_space<vmem>>, vector<1x64xf32>,
    %c3 = arith.constant 3 : index
    %22 = memref.load %arg1[%c3] : memref<96xi32, #tpu.memory_space<smem>>
    %23 = arith.index_cast %22 : i32 to index
    %c0_22 = arith.constant 0 : index
    %24 = vector.load %arg6[%23, %c0_22] : memref<40x64xf32, #tpu.memory_space<vmem>>, vector<1x64xf32>
    %c3_23 = arith.constant 3 : index
    %c0_24 = arith.constant 0 : index
    %25 = vector.load %arg8[%c3_23, %c0_24] : memref<24x64xf32, #tpu.memory_space<vmem>>, vector<1x64xf32>
    tpu.vector_store %arg8[%c3_23, %c0_24], %24 {strides = array<i32>} : memref<24x64xf32, #tpu.memory_space<vmem>>, vector<1x64xf32>,
    %c4 = arith.constant 4 : index
    %26 = memref.load %arg1[%c4] : memref<96xi32, #tpu.memory_space<smem>>
    %27 = arith.index_cast %26 : i32 to index
    %c0_25 = arith.constant 0 : index
    %28 = vector.load %arg6[%27, %c0_25] : memref<40x64xf32, #tpu.memory_space<vmem>>, vector<1x64xf32>
    %c4_26 = arith.constant 4 : index
    %c0_27 = arith.constant 0 : index
    %29 = vector.load %arg8[%c4_26, %c0_27] : memref<24x64xf32, #tpu.memory_space<vmem>>, vector<1x64xf32>
    tpu.vector_store %arg8[%c4_26, %c0_27], %28 {strides = array<i32>} : memref<24x64xf32, #tpu.memory_space<vmem>>, vector<1x64xf32>,
    %c5 = arith.constant 5 : index
    %30 = memref.load %arg1[%c5] : memref<96xi32, #tpu.memory_space<smem>>
    %31 = arith.index_cast %30 : i32 to index
    %c0_28 = arith.constant 0 : index
    %32 = vector.load %arg6[%31, %c0_28] : memref<40x64xf32, #tpu.memory_space<vmem>>, vector<1x64xf32>
    %c5_29 = arith.constant 5 : index
    %c0_30 = arith.constant 0 : index
    %33 = vector.load %arg8[%c5_29, %c0_30] : memref<24x64xf32, #tpu.memory_space<vmem>>, vector<1x64xf32>
    tpu.vector_store %arg8[%c5_29, %c0_30], %32 {strides = array<i32>} : memref<24x64xf32, #tpu.memory_space<vmem>>, vector<1x64xf32>,
    %c6 = arith.constant 6 : index
    %34 = memref.load %arg1[%c6] : memref<96xi32, #tpu.memory_space<smem>>
    %35 = arith.index_cast %34 : i32 to index
    %c0_31 = arith.constant 0 : index
    %36 = vector.load %arg6[%35, %c0_31] : memref<40x64xf32, #tpu.memory_space<vmem>>, vector<1x64xf32>
    %c6_32 = arith.constant 6 : index
    %c0_33 = arith.constant 0 : index
    %37 = vector.load %arg8[%c6_32, %c0_33] : memref<24x64xf32, #tpu.memory_space<vmem>>, vector<1x64xf32>
    tpu.vector_store %arg8[%c6_32, %c0_33], %36 {strides = array<i32>} : memref<24x64xf32, #tpu.memory_space<vmem>>, vector<1x64xf32>,
    %c7 = arith.constant 7 : index
    %38 = memref.load %arg1[%c7] : memref<96xi32, #tpu.memory_space<smem>>
    %39 = arith.index_cast %38 : i32 to index
    %c0_34 = arith.constant 0 : index
    %40 = vector.load %arg6[%39, %c0_34] : memref<40x64xf32, #tpu.memory_space<vmem>>, vector<1x64xf32>
    %c7_35 = arith.constant 7 : index
    %c0_36 = arith.constant 0 : index
    %41 = vector.load %arg8[%c7_35, %c0_36] : memref<24x64xf32, #tpu.memory_space<vmem>>, vector<1x64xf32>
    tpu.vector_store %arg8[%c7_35, %c0_36], %40 {strides = array<i32>} : memref<24x64xf32, #tpu.memory_space<vmem>>, vector<1x64xf32>,
    %c8 = arith.constant 8 : index
    %42 = memref.load %arg1[%c8] : memref<96xi32, #tpu.memory_space<smem>>
    %43 = arith.index_cast %42 : i32 to index
    %c0_37 = arith.constant 0 : index
    %44 = vector.load %arg6[%43, %c0_37] : memref<40x64xf32, #tpu.memory_space<vmem>>, vector<1x64xf32>
    %c8_38 = arith.constant 8 : index
    %c0_39 = arith.constant 0 : index
    %45 = vector.load %arg8[%c8_38, %c0_39] : memref<24x64xf32, #tpu.memory_space<vmem>>, vector<1x64xf32>
    tpu.vector_store %arg8[%c8_38, %c0_39], %44 {strides = array<i32>} : memref<24x64xf32, #tpu.memory_space<vmem>>, vector<1x64xf32>,
    %c9 = arith.constant 9 : index
    %46 = memref.load %arg1[%c9] : memref<96xi32, #tpu.memory_space<smem>>
    %47 = arith.index_cast %46 : i32 to index
    %c0_40 = arith.constant 0 : index
    %48 = vector.load %arg6[%47, %c0_40] : memref<40x64xf32, #tpu.memory_space<vmem>>, vector<1x64xf32>
    %c9_41 = arith.constant 9 : index
    %c0_42 = arith.constant 0 : index
    %49 = vector.load %arg8[%c9_41, %c0_42] : memref<24x64xf32, #tpu.memory_space<vmem>>, vector<1x64xf32>
    tpu.vector_store %arg8[%c9_41, %c0_42], %48 {strides = array<i32>} : memref<24x64xf32, #tpu.memory_space<vmem>>, vector<1x64xf32>,
    %c10 = arith.constant 10 : index
    %50 = memref.load %arg1[%c10] : memref<96xi32, #tpu.memory_space<smem>>
    %51 = arith.index_cast %50 : i32 to index
    %c0_43 = arith.constant 0 : index
    %52 = vector.load %arg6[%51, %c0_43] : memref<40x64xf32, #tpu.memory_space<vmem>>, vector<1x64xf32>
    %c10_44 = arith.constant 10 : index
    %c0_45 = arith.constant 0 : index
    %53 = vector.load %arg8[%c10_44, %c0_45] : memref<24x64xf32, #tpu.memory_space<vmem>>, vector<1x64xf32>
    tpu.vector_store %arg8[%c10_44, %c0_45], %52 {strides = array<i32>} : memref<24x64xf32, #tpu.memory_space<vmem>>, vector<1x64xf32>,
    %c11 = arith.constant 11 : index
    %54 = memref.load %arg1[%c11] : memref<96xi32, #tpu.memory_space<smem>>
    %55 = arith.index_cast %54 : i32 to index
    %c0_46 = arith.constant 0 : index
    %56 = vector.load %arg6[%55, %c0_46] : memref<40x64xf32, #tpu.memory_space<vmem>>, vector<1x64xf32>
    %c11_47 = arith.constant 11 : index
    %c0_48 = arith.constant 0 : index
    %57 = vector.load %arg8[%c11_47, %c0_48] : memref<24x64xf32, #tpu.memory_space<vmem>>, vector<1x64xf32>
    tpu.vector_store %arg8[%c11_47, %c0_48], %56 {strides = array<i32>} : memref<24x64xf32, #tpu.memory_space<vmem>>, vector<1x64xf32>,
    %c12 = arith.constant 12 : index
    %58 = memref.load %arg1[%c12] : memref<96xi32, #tpu.memory_space<smem>>
    %59 = arith.index_cast %58 : i32 to index
    %c0_49 = arith.constant 0 : index
    %60 = vector.load %arg6[%59, %c0_49] : memref<40x64xf32, #tpu.memory_space<vmem>>, vector<1x64xf32>
    %c12_50 = arith.constant 12 : index
    %c0_51 = arith.constant 0 : index
    %61 = vector.load %arg8[%c12_50, %c0_51] : memref<24x64xf32, #tpu.memory_space<vmem>>, vector<1x64xf32>
    tpu.vector_store %arg8[%c12_50, %c0_51], %60 {strides = array<i32>} : memref<24x64xf32, #tpu.memory_space<vmem>>, vector<1x64xf32>,
    %c13 = arith.constant 13 : index
    %62 = memref.load %arg1[%c13] : memref<96xi32, #tpu.memory_space<smem>>
    %63 = arith.index_cast %62 : i32 to index
    %c0_52 = arith.constant 0 : index
    %64 = vector.load %arg6[%63, %c0_52] : memref<40x64xf32, #tpu.memory_space<vmem>>, vector<1x64xf32>
    %c13_53 = arith.constant 13 : index
    %c0_54 = arith.constant 0 : index
    %65 = vector.load %arg8[%c13_53, %c0_54] : memref<24x64xf32, #tpu.memory_space<vmem>>, vector<1x64xf32>
    tpu.vector_store %arg8[%c13_53, %c0_54], %64 {strides = array<i32>} : memref<24x64xf32, #tpu.memory_space<vmem>>, vector<1x64xf32>,
    %c14 = arith.constant 14 : index
    %66 = memref.load %arg1[%c14] : memref<96xi32, #tpu.memory_space<smem>>
    %67 = arith.index_cast %66 : i32 to index
    %c0_55 = arith.constant 0 : index
    %68 = vector.load %arg6[%67, %c0_55] : memref<40x64xf32, #tpu.memory_space<vmem>>, vector<1x64xf32>
    %c14_56 = arith.constant 14 : index
    %c0_57 = arith.constant 0 : index
    %69 = vector.load %arg8[%c14_56, %c0_57] : memref<24x64xf32, #tpu.memory_space<vmem>>, vector<1x64xf32>
    tpu.vector_store %arg8[%c14_56, %c0_57], %68 {strides = array<i32>} : memref<24x64xf32, #tpu.memory_space<vmem>>, vector<1x64xf32>,
    %c15 = arith.constant 15 : index
    %70 = memref.load %arg1[%c15] : memref<96xi32, #tpu.memory_space<smem>>
    %71 = arith.index_cast %70 : i32 to index
    %c0_58 = arith.constant 0 : index
    %72 = vector.load %arg6[%71, %c0_58] : memref<40x64xf32, #tpu.memory_space<vmem>>, vector<1x64xf32>
    %c15_59 = arith.constant 15 : index
    %c0_60 = arith.constant 0 : index
    %73 = vector.load %arg8[%c15_59, %c0_60] : memref<24x64xf32, #tpu.memory_space<vmem>>, vector<1x64xf32>
    tpu.vector_store %arg8[%c15_59, %c0_60], %72 {strides = array<i32>} : memref<24x64xf32, #tpu.memory_space<vmem>>, vector<1x64xf32>,
    %c16 = arith.constant 16 : index
    %74 = memref.load %arg1[%c16] : memref<96xi32, #tpu.memory_space<smem>>
    %75 = arith.index_cast %74 : i32 to index
    %c0_61 = arith.constant 0 : index
    %76 = vector.load %arg6[%75, %c0_61] : memref<40x64xf32, #tpu.memory_space<vmem>>, vector<1x64xf32>
    %c16_62 = arith.constant 16 : index
    %c0_63 = arith.constant 0 : index
    %77 = vector.load %arg8[%c16_62, %c0_63] : memref<24x64xf32, #tpu.memory_space<vmem>>, vector<1x64xf32>
    tpu.vector_store %arg8[%c16_62, %c0_63], %76 {strides = array<i32>} : memref<24x64xf32, #tpu.memory_space<vmem>>, vector<1x64xf32>,
    %c17 = arith.constant 17 : index
    %78 = memref.load %arg1[%c17] : memref<96xi32, #tpu.memory_space<smem>>
    %79 = arith.index_cast %78 : i32 to index
    %c0_64 = arith.constant 0 : index
    %80 = vector.load %arg6[%79, %c0_64] : memref<40x64xf32, #tpu.memory_space<vmem>>, vector<1x64xf32>
    %c17_65 = arith.constant 17 : index
    %c0_66 = arith.constant 0 : index
    %81 = vector.load %arg8[%c17_65, %c0_66] : memref<24x64xf32, #tpu.memory_space<vmem>>, vector<1x64xf32>
    tpu.vector_store %arg8[%c17_65, %c0_66], %80 {strides = array<i32>} : memref<24x64xf32, #tpu.memory_space<vmem>>, vector<1x64xf32>,
    %c18 = arith.constant 18 : index
    %82 = memref.load %arg1[%c18] : memref<96xi32, #tpu.memory_space<smem>>
    %83 = arith.index_cast %82 : i32 to index
    %c0_67 = arith.constant 0 : index
    %84 = vector.load %arg6[%83, %c0_67] : memref<40x64xf32, #tpu.memory_space<vmem>>, vector<1x64xf32>
    %c18_68 = arith.constant 18 : index
    %c0_69 = arith.constant 0 : index
    %85 = vector.load %arg8[%c18_68, %c0_69] : memref<24x64xf32, #tpu.memory_space<vmem>>, vector<1x64xf32>
    tpu.vector_store %arg8[%c18_68, %c0_69], %84 {strides = array<i32>} : memref<24x64xf32, #tpu.memory_space<vmem>>, vector<1x64xf32>,
    %c19 = arith.constant 19 : index
    %86 = memref.load %arg1[%c19] : memref<96xi32, #tpu.memory_space<smem>>
    %87 = arith.index_cast %86 : i32 to index
    %c0_70 = arith.constant 0 : index
    %88 = vector.load %arg6[%87, %c0_70] : memref<40x64xf32, #tpu.memory_space<vmem>>, vector<1x64xf32>
    %c19_71 = arith.constant 19 : index
    %c0_72 = arith.constant 0 : index
    %89 = vector.load %arg8[%c19_71, %c0_72] : memref<24x64xf32, #tpu.memory_space<vmem>>, vector<1x64xf32>
    tpu.vector_store %arg8[%c19_71, %c0_72], %88 {strides = array<i32>} : memref<24x64xf32, #tpu.memory_space<vmem>>, vector<1x64xf32>,
    %c20 = arith.constant 20 : index
    %90 = memref.load %arg1[%c20] : memref<96xi32, #tpu.memory_space<smem>>
    %91 = arith.index_cast %90 : i32 to index
    %c0_73 = arith.constant 0 : index
    %92 = vector.load %arg6[%91, %c0_73] : memref<40x64xf32, #tpu.memory_space<vmem>>, vector<1x64xf32>
    %c20_74 = arith.constant 20 : index
    %c0_75 = arith.constant 0 : index
    %93 = vector.load %arg8[%c20_74, %c0_75] : memref<24x64xf32, #tpu.memory_space<vmem>>, vector<1x64xf32>
    tpu.vector_store %arg8[%c20_74, %c0_75], %92 {strides = array<i32>} : memref<24x64xf32, #tpu.memory_space<vmem>>, vector<1x64xf32>,
    %c21 = arith.constant 21 : index
    %94 = memref.load %arg1[%c21] : memref<96xi32, #tpu.memory_space<smem>>
    %95 = arith.index_cast %94 : i32 to index
    %c0_76 = arith.constant 0 : index
    %96 = vector.load %arg6[%95, %c0_76] : memref<40x64xf32, #tpu.memory_space<vmem>>, vector<1x64xf32>
    %c21_77 = arith.constant 21 : index
    %c0_78 = arith.constant 0 : index
    %97 = vector.load %arg8[%c21_77, %c0_78] : memref<24x64xf32, #tpu.memory_space<vmem>>, vector<1x64xf32>
    tpu.vector_store %arg8[%c21_77, %c0_78], %96 {strides = array<i32>} : memref<24x64xf32, #tpu.memory_space<vmem>>, vector<1x64xf32>,
    %c22 = arith.constant 22 : index
    %98 = memref.load %arg1[%c22] : memref<96xi32, #tpu.memory_space<smem>>
    %99 = arith.index_cast %98 : i32 to index
    %c0_79 = arith.constant 0 : index
    %100 = vector.load %arg6[%99, %c0_79] : memref<40x64xf32, #tpu.memory_space<vmem>>, vector<1x64xf32>
    %c22_80 = arith.constant 22 : index
    %c0_81 = arith.constant 0 : index
    %101 = vector.load %arg8[%c22_80, %c0_81] : memref<24x64xf32, #tpu.memory_space<vmem>>, vector<1x64xf32>
    tpu.vector_store %arg8[%c22_80, %c0_81], %100 {strides = array<i32>} : memref<24x64xf32, #tpu.memory_space<vmem>>, vector<1x64xf32>,
    %c23 = arith.constant 23 : index
    %102 = memref.load %arg1[%c23] : memref<96xi32, #tpu.memory_space<smem>>
    %103 = arith.index_cast %102 : i32 to index
    %c0_82 = arith.constant 0 : index
    %104 = vector.load %arg6[%103, %c0_82] : memref<40x64xf32, #tpu.memory_space<vmem>>, vector<1x64xf32>
    %c23_83 = arith.constant 23 : index
    %c0_84 = arith.constant 0 : index
    %105 = vector.load %arg8[%c23_83, %c0_84] : memref<24x64xf32, #tpu.memory_space<vmem>>, vector<1x64xf32>
    tpu.vector_store %arg8[%c23_83, %c0_84], %104 {strides = array<i32>} : memref<24x64xf32, #tpu.memory_space<vmem>>, vector<1x64xf32>,
    %c0_85 = arith.constant 0 : index
    %c0_86 = arith.constant 0 : index
    %106 = vector.load %arg8[%c0_85, %c0_86] : memref<24x64xf32, #tpu.memory_space<vmem>>, vector<24x64xf32>
    %107 = vector.extract_strided_slice %106 {offsets = [0, 32], sizes = [24, 32], strides = [1, 1]} : vector<24x64xf32> to vector<24x32xf32>
    %cst_87 = arith.constant dense<0.000000e+00> : vector<24x128xf32>
    %108 = tpu.matmul %107, %9, %cst_87 {dimension_numbers = #tpu.dot_dimension_numbers<[1], [0], [0], [1], [0, 0, 1, 1], [], []>} : vector<24x32xf32>, vector<32x128xf32>, vector<24x128xf32> -> vector<24x128xf32>
    %c0_88 = arith.constant 0 : index
    %c0_89 = arith.constant 0 : index
    %109 = vector.load %arg7[%c0_88, %c0_89] : memref<32x128xf32, #tpu.memory_space<vmem>>, vector<8x128xf32>
    %110 = vector.extract_strided_slice %109 {offsets = [0, 96], sizes = [8, 32], strides = [1, 1]} : vector<8x128xf32> to vector<8x32xf32>
    %111 = vector.extract_strided_slice %108 {offsets = [0, 0], sizes = [8, 96], strides = [1, 1]} : vector<24x128xf32> to vector<8x96xf32>
    %112 = vector.extract_strided_slice %108 {offsets = [0, 96], sizes = [8, 32], strides = [1, 1]} : vector<24x128xf32> to vector<8x32xf32>
    %113 = arith.addf %112, %110 : vector<8x32xf32>
    %114 = arith.negf %113 : vector<8x32xf32>
    %115 = math.exp %114 : vector<8x32xf32>
    %cst_90 = arith.constant 1.000000e+00 : f32
    %116 = vector.broadcast %cst_90 : f32 to vector<8x32xf32>
    %117 = arith.addf %116, %115 : vector<8x32xf32>
    %118 = arith.divf %116, %117 : vector<8x32xf32>
    %119 = vector.extract_strided_slice %106 {offsets = [0, 0], sizes = [8, 32], strides = [1, 1]} : vector<24x64xf32> to vector<8x32xf32>
    %120 = arith.mulf %118, %119 : vector<8x32xf32>
    %121 = vector.extract_strided_slice %108 {offsets = [8, 0], sizes = [8, 96], strides = [1, 1]} : vector<24x128xf32> to vector<8x96xf32>
    %122 = arith.addf %111, %121 : vector<8x96xf32>
    %123 = vector.extract_strided_slice %108 {offsets = [8, 96], sizes = [8, 32], strides = [1, 1]} : vector<24x128xf32> to vector<8x32xf32>
    %124 = arith.addf %123, %110 : vector<8x32xf32>
    %125 = arith.negf %124 : vector<8x32xf32>
    %126 = math.exp %125 : vector<8x32xf32>
    %cst_91 = arith.constant 1.000000e+00 : f32
    %127 = vector.broadcast %cst_91 : f32 to vector<8x32xf32>
    %128 = arith.addf %127, %126 : vector<8x32xf32>
    %129 = arith.divf %127, %128 : vector<8x32xf32>
    %130 = vector.extract_strided_slice %106 {offsets = [8, 0], sizes = [8, 32], strides = [1, 1]} : vector<24x64xf32> to vector<8x32xf32>
    %131 = arith.mulf %129, %130 : vector<8x32xf32>
    %132 = arith.addf %120, %131 : vector<8x32xf32>
    %133 = vector.extract_strided_slice %108 {offsets = [16, 0], sizes = [8, 96], strides = [1, 1]} : vector<24x128xf32> to vector<8x96xf32>
    %134 = arith.addf %122, %133 : vector<8x96xf32>
    %135 = vector.extract_strided_slice %108 {offsets = [16, 96], sizes = [8, 32], strides = [1, 1]} : vector<24x128xf32> to vector<8x32xf32>
    %136 = arith.addf %135, %110 : vector<8x32xf32>
    %137 = arith.negf %136 : vector<8x32xf32>
    %138 = math.exp %137 : vector<8x32xf32>
    %cst_92 = arith.constant 1.000000e+00 : f32
    %139 = vector.broadcast %cst_92 : f32 to vector<8x32xf32>
    %140 = arith.addf %139, %138 : vector<8x32xf32>
    %141 = arith.divf %139, %140 : vector<8x32xf32>
    %142 = vector.extract_strided_slice %106 {offsets = [16, 0], sizes = [8, 32], strides = [1, 1]} : vector<24x64xf32> to vector<8x32xf32>
    %143 = arith.mulf %141, %142 : vector<8x32xf32>
    %144 = arith.addf %132, %143 : vector<8x32xf32>
    %145 = vector.extract_strided_slice %109 {offsets = [0, 0], sizes = [8, 96], strides = [1, 1]} : vector<8x128xf32> to vector<8x96xf32>
    %146 = arith.addf %145, %134 : vector<8x96xf32>
    %147 = vector.extract_strided_slice %146 {offsets = [0, 0], sizes = [8, 64], strides = [1, 1]} : vector<8x96xf32> to vector<8x64xf32>
    %148 = arith.negf %147 : vector<8x64xf32>
    %149 = math.exp %148 : vector<8x64xf32>
    %cst_93 = arith.constant 1.000000e+00 : f32
    %150 = vector.broadcast %cst_93 : f32 to vector<8x64xf32>
    %151 = arith.addf %150, %149 : vector<8x64xf32>
    %152 = arith.divf %150, %151 : vector<8x64xf32>
    %153 = vector.extract_strided_slice %152 {offsets = [0, 0], sizes = [8, 32], strides = [1, 1]} : vector<8x64xf32> to vector<8x32xf32>
    %154 = vector.extract_strided_slice %152 {offsets = [0, 32], sizes = [8, 32], strides = [1, 1]} : vector<8x64xf32> to vector<8x32xf32>
    %155 = vector.extract_strided_slice %146 {offsets = [0, 64], sizes = [8, 32], strides = [1, 1]} : vector<8x96xf32> to vector<8x32xf32>
    %156 = math.tanh %155 : vector<8x32xf32>
    %157 = arith.mulf %153, %156 : vector<8x32xf32>
    %158 = arith.addf %157, %144 : vector<8x32xf32>
    %159 = math.tanh %158 : vector<8x32xf32>
    %160 = arith.mulf %154, %159 : vector<8x32xf32>
    %161 = tpu.concatenate %158, %160 in 1 : vector<8x32xf32>, vector<8x32xf32> -> vector<8x64xf32>
    %c0_94 = arith.constant 0 : index
    %c0_95 = arith.constant 0 : index
    %162 = vector.load %arg6[%c0_94, %c0_95] : memref<40x64xf32, #tpu.memory_space<vmem>>, vector<8x64xf32>
    tpu.vector_store %arg6[%c0_94, %c0_95], %161 {strides = array<i32>} : memref<40x64xf32, #tpu.memory_space<vmem>>, vector<8x64xf32>,
    %c24 = arith.constant 24 : index
    %163 = memref.load %arg1[%c24] : memref<96xi32, #tpu.memory_space<smem>>
    %164 = arith.index_cast %163 : i32 to index
    %c0_96 = arith.constant 0 : index
    %165 = vector.load %arg6[%164, %c0_96] : memref<40x64xf32, #tpu.memory_space<vmem>>, vector<1x64xf32>
    %c0_97 = arith.constant 0 : index
    %c0_98 = arith.constant 0 : index
    %166 = vector.load %arg8[%c0_97, %c0_98] : memref<24x64xf32, #tpu.memory_space<vmem>>, vector<1x64xf32>
    tpu.vector_store %arg8[%c0_97, %c0_98], %165 {strides = array<i32>} : memref<24x64xf32, #tpu.memory_space<vmem>>, vector<1x64xf32>,
    %c25 = arith.constant 25 : index
    %167 = memref.load %arg1[%c25] : memref<96xi32, #tpu.memory_space<smem>>
    %168 = arith.index_cast %167 : i32 to index
    %c0_99 = arith.constant 0 : index
    %169 = vector.load %arg6[%168, %c0_99] : memref<40x64xf32, #tpu.memory_space<vmem>>, vector<1x64xf32>
    %c1_100 = arith.constant 1 : index
    %c0_101 = arith.constant 0 : index
    %170 = vector.load %arg8[%c1_100, %c0_101] : memref<24x64xf32, #tpu.memory_space<vmem>>, vector<1x64xf32>
    tpu.vector_store %arg8[%c1_100, %c0_101], %169 {strides = array<i32>} : memref<24x64xf32, #tpu.memory_space<vmem>>, vector<1x64xf32>,
    %c26 = arith.constant 26 : index
    %171 = memref.load %arg1[%c26] : memref<96xi32, #tpu.memory_space<smem>>
    %172 = arith.index_cast %171 : i32 to index
    %c0_102 = arith.constant 0 : index
    %173 = vector.load %arg6[%172, %c0_102] : memref<40x64xf32, #tpu.memory_space<vmem>>, vector<1x64xf32>
    %c2_103 = arith.constant 2 : index
    %c0_104 = arith.constant 0 : index
    %174 = vector.load %arg8[%c2_103, %c0_104] : memref<24x64xf32, #tpu.memory_space<vmem>>, vector<1x64xf32>
    tpu.vector_store %arg8[%c2_103, %c0_104], %173 {strides = array<i32>} : memref<24x64xf32, #tpu.memory_space<vmem>>, vector<1x64xf32>,
    %c27 = arith.constant 27 : index
    %175 = memref.load %arg1[%c27] : memref<96xi32, #tpu.memory_space<smem>>
    %176 = arith.index_cast %175 : i32 to index
    %c0_105 = arith.constant 0 : index
    %177 = vector.load %arg6[%176, %c0_105] : memref<40x64xf32, #tpu.memory_space<vmem>>, vector<1x64xf32>
    %c3_106 = arith.constant 3 : index
    %c0_107 = arith.constant 0 : index
    %178 = vector.load %arg8[%c3_106, %c0_107] : memref<24x64xf32, #tpu.memory_space<vmem>>, vector<1x64xf32>
    tpu.vector_store %arg8[%c3_106, %c0_107], %177 {strides = array<i32>} : memref<24x64xf32, #tpu.memory_space<vmem>>, vector<1x64xf32>,
    %c28 = arith.constant 28 : index
    %179 = memref.load %arg1[%c28] : memref<96xi32, #tpu.memory_space<smem>>
    %180 = arith.index_cast %179 : i32 to index
    %c0_108 = arith.constant 0 : index
    %181 = vector.load %arg6[%180, %c0_108] : memref<40x64xf32, #tpu.memory_space<vmem>>, vector<1x64xf32>
    %c4_109 = arith.constant 4 : index
    %c0_110 = arith.constant 0 : index
    %182 = vector.load %arg8[%c4_109, %c0_110] : memref<24x64xf32, #tpu.memory_space<vmem>>, vector<1x64xf32>
    tpu.vector_store %arg8[%c4_109, %c0_110], %181 {strides = array<i32>} : memref<24x64xf32, #tpu.memory_space<vmem>>, vector<1x64xf32>,
    %c29 = arith.constant 29 : index
    %183 = memref.load %arg1[%c29] : memref<96xi32, #tpu.memory_space<smem>>
    %184 = arith.index_cast %183 : i32 to index
    %c0_111 = arith.constant 0 : index
    %185 = vector.load %arg6[%184, %c0_111] : memref<40x64xf32, #tpu.memory_space<vmem>>, vector<1x64xf32>
    %c5_112 = arith.constant 5 : index
    %c0_113 = arith.constant 0 : index
    %186 = vector.load %arg8[%c5_112, %c0_113] : memref<24x64xf32, #tpu.memory_space<vmem>>, vector<1x64xf32>
    tpu.vector_store %arg8[%c5_112, %c0_113], %185 {strides = array<i32>} : memref<24x64xf32, #tpu.memory_space<vmem>>, vector<1x64xf32>,
    %c30 = arith.constant 30 : index
    %187 = memref.load %arg1[%c30] : memref<96xi32, #tpu.memory_space<smem>>
    %188 = arith.index_cast %187 : i32 to index
    %c0_114 = arith.constant 0 : index
    %189 = vector.load %arg6[%188, %c0_114] : memref<40x64xf32, #tpu.memory_space<vmem>>, vector<1x64xf32>
    %c6_115 = arith.constant 6 : index
    %c0_116 = arith.constant 0 : index
    %190 = vector.load %arg8[%c6_115, %c0_116] : memref<24x64xf32, #tpu.memory_space<vmem>>, vector<1x64xf32>
    tpu.vector_store %arg8[%c6_115, %c0_116], %189 {strides = array<i32>} : memref<24x64xf32, #tpu.memory_space<vmem>>, vector<1x64xf32>,
    %c31 = arith.constant 31 : index
    %191 = memref.load %arg1[%c31] : memref<96xi32, #tpu.memory_space<smem>>
    %192 = arith.index_cast %191 : i32 to index
    %c0_117 = arith.constant 0 : index
    %193 = vector.load %arg6[%192, %c0_117] : memref<40x64xf32, #tpu.memory_space<vmem>>, vector<1x64xf32>
    %c7_118 = arith.constant 7 : index
    %c0_119 = arith.constant 0 : index
    %194 = vector.load %arg8[%c7_118, %c0_119] : memref<24x64xf32, #tpu.memory_space<vmem>>, vector<1x64xf32>
    tpu.vector_store %arg8[%c7_118, %c0_119], %193 {strides = array<i32>} : memref<24x64xf32, #tpu.memory_space<vmem>>, vector<1x64xf32>,
    %c32 = arith.constant 32 : index
    %195 = memref.load %arg1[%c32] : memref<96xi32, #tpu.memory_space<smem>>
    %196 = arith.index_cast %195 : i32 to index
    %c0_120 = arith.constant 0 : index
    %197 = vector.load %arg6[%196, %c0_120] : memref<40x64xf32, #tpu.memory_space<vmem>>, vector<1x64xf32>
    %c8_121 = arith.constant 8 : index
    %c0_122 = arith.constant 0 : index
    %198 = vector.load %arg8[%c8_121, %c0_122] : memref<24x64xf32, #tpu.memory_space<vmem>>, vector<1x64xf32>
    tpu.vector_store %arg8[%c8_121, %c0_122], %197 {strides = array<i32>} : memref<24x64xf32, #tpu.memory_space<vmem>>, vector<1x64xf32>,
    %c33 = arith.constant 33 : index
    %199 = memref.load %arg1[%c33] : memref<96xi32, #tpu.memory_space<smem>>
    %200 = arith.index_cast %199 : i32 to index
    %c0_123 = arith.constant 0 : index
    %201 = vector.load %arg6[%200, %c0_123] : memref<40x64xf32, #tpu.memory_space<vmem>>, vector<1x64xf32>
    %c9_124 = arith.constant 9 : index
    %c0_125 = arith.constant 0 : index
    %202 = vector.load %arg8[%c9_124, %c0_125] : memref<24x64xf32, #tpu.memory_space<vmem>>, vector<1x64xf32>
    tpu.vector_store %arg8[%c9_124, %c0_125], %201 {strides = array<i32>} : memref<24x64xf32, #tpu.memory_space<vmem>>, vector<1x64xf32>,
    %c34 = arith.constant 34 : index
    %203 = memref.load %arg1[%c34] : memref<96xi32, #tpu.memory_space<smem>>
    %204 = arith.index_cast %203 : i32 to index
    %c0_126 = arith.constant 0 : index
    %205 = vector.load %arg6[%204, %c0_126] : memref<40x64xf32, #tpu.memory_space<vmem>>, vector<1x64xf32>
    %c10_127 = arith.constant 10 : index
    %c0_128 = arith.constant 0 : index
    %206 = vector.load %arg8[%c10_127, %c0_128] : memref<24x64xf32, #tpu.memory_space<vmem>>, vector<1x64xf32>
    tpu.vector_store %arg8[%c10_127, %c0_128], %205 {strides = array<i32>} : memref<24x64xf32, #tpu.memory_space<vmem>>, vector<1x64xf32>,
    %c35 = arith.constant 35 : index
    %207 = memref.load %arg1[%c35] : memref<96xi32, #tpu.memory_space<smem>>
    %208 = arith.index_cast %207 : i32 to index
    %c0_129 = arith.constant 0 : index
    %209 = vector.load %arg6[%208, %c0_129] : memref<40x64xf32, #tpu.memory_space<vmem>>, vector<1x64xf32>
    %c11_130 = arith.constant 11 : index
    %c0_131 = arith.constant 0 : index
    %210 = vector.load %arg8[%c11_130, %c0_131] : memref<24x64xf32, #tpu.memory_space<vmem>>, vector<1x64xf32>
    tpu.vector_store %arg8[%c11_130, %c0_131], %209 {strides = array<i32>} : memref<24x64xf32, #tpu.memory_space<vmem>>, vector<1x64xf32>,
    %c36 = arith.constant 36 : index
    %211 = memref.load %arg1[%c36] : memref<96xi32, #tpu.memory_space<smem>>
    %212 = arith.index_cast %211 : i32 to index
    %c0_132 = arith.constant 0 : index
    %213 = vector.load %arg6[%212, %c0_132] : memref<40x64xf32, #tpu.memory_space<vmem>>, vector<1x64xf32>
    %c12_133 = arith.constant 12 : index
    %c0_134 = arith.constant 0 : index
    %214 = vector.load %arg8[%c12_133, %c0_134] : memref<24x64xf32, #tpu.memory_space<vmem>>, vector<1x64xf32>
    tpu.vector_store %arg8[%c12_133, %c0_134], %213 {strides = array<i32>} : memref<24x64xf32, #tpu.memory_space<vmem>>, vector<1x64xf32>,
    %c37 = arith.constant 37 : index
    %215 = memref.load %arg1[%c37] : memref<96xi32, #tpu.memory_space<smem>>
    %216 = arith.index_cast %215 : i32 to index
    %c0_135 = arith.constant 0 : index
    %217 = vector.load %arg6[%216, %c0_135] : memref<40x64xf32, #tpu.memory_space<vmem>>, vector<1x64xf32>
    %c13_136 = arith.constant 13 : index
    %c0_137 = arith.constant 0 : index
    %218 = vector.load %arg8[%c13_136, %c0_137] : memref<24x64xf32, #tpu.memory_space<vmem>>, vector<1x64xf32>
    tpu.vector_store %arg8[%c13_136, %c0_137], %217 {strides = array<i32>} : memref<24x64xf32, #tpu.memory_space<vmem>>, vector<1x64xf32>,
    %c38 = arith.constant 38 : index
    %219 = memref.load %arg1[%c38] : memref<96xi32, #tpu.memory_space<smem>>
    %220 = arith.index_cast %219 : i32 to index
    %c0_138 = arith.constant 0 : index
    %221 = vector.load %arg6[%220, %c0_138] : memref<40x64xf32, #tpu.memory_space<vmem>>, vector<1x64xf32>
    %c14_139 = arith.constant 14 : index
    %c0_140 = arith.constant 0 : index
    %222 = vector.load %arg8[%c14_139, %c0_140] : memref<24x64xf32, #tpu.memory_space<vmem>>, vector<1x64xf32>
    tpu.vector_store %arg8[%c14_139, %c0_140], %221 {strides = array<i32>} : memref<24x64xf32, #tpu.memory_space<vmem>>, vector<1x64xf32>,
    %c39 = arith.constant 39 : index
    %223 = memref.load %arg1[%c39] : memref<96xi32, #tpu.memory_space<smem>>
    %224 = arith.index_cast %223 : i32 to index
    %c0_141 = arith.constant 0 : index
    %225 = vector.load %arg6[%224, %c0_141] : memref<40x64xf32, #tpu.memory_space<vmem>>, vector<1x64xf32>
    %c15_142 = arith.constant 15 : index
    %c0_143 = arith.constant 0 : index
    %226 = vector.load %arg8[%c15_142, %c0_143] : memref<24x64xf32, #tpu.memory_space<vmem>>, vector<1x64xf32>
    tpu.vector_store %arg8[%c15_142, %c0_143], %225 {strides = array<i32>} : memref<24x64xf32, #tpu.memory_space<vmem>>, vector<1x64xf32>,
    %c40 = arith.constant 40 : index
    %227 = memref.load %arg1[%c40] : memref<96xi32, #tpu.memory_space<smem>>
    %228 = arith.index_cast %227 : i32 to index
    %c0_144 = arith.constant 0 : index
    %229 = vector.load %arg6[%228, %c0_144] : memref<40x64xf32, #tpu.memory_space<vmem>>, vector<1x64xf32>
    %c16_145 = arith.constant 16 : index
    %c0_146 = arith.constant 0 : index
    %230 = vector.load %arg8[%c16_145, %c0_146] : memref<24x64xf32, #tpu.memory_space<vmem>>, vector<1x64xf32>
    tpu.vector_store %arg8[%c16_145, %c0_146], %229 {strides = array<i32>} : memref<24x64xf32, #tpu.memory_space<vmem>>, vector<1x64xf32>,
    %c41 = arith.constant 41 : index
    %231 = memref.load %arg1[%c41] : memref<96xi32, #tpu.memory_space<smem>>
    %232 = arith.index_cast %231 : i32 to index
    %c0_147 = arith.constant 0 : index
    %233 = vector.load %arg6[%232, %c0_147] : memref<40x64xf32, #tpu.memory_space<vmem>>, vector<1x64xf32>
    %c17_148 = arith.constant 17 : index
    %c0_149 = arith.constant 0 : index
    %234 = vector.load %arg8[%c17_148, %c0_149] : memref<24x64xf32, #tpu.memory_space<vmem>>, vector<1x64xf32>
    tpu.vector_store %arg8[%c17_148, %c0_149], %233 {strides = array<i32>} : memref<24x64xf32, #tpu.memory_space<vmem>>, vector<1x64xf32>,
    %c42 = arith.constant 42 : index
    %235 = memref.load %arg1[%c42] : memref<96xi32, #tpu.memory_space<smem>>
    %236 = arith.index_cast %235 : i32 to index
    %c0_150 = arith.constant 0 : index
    %237 = vector.load %arg6[%236, %c0_150] : memref<40x64xf32, #tpu.memory_space<vmem>>, vector<1x64xf32>
    %c18_151 = arith.constant 18 : index
    %c0_152 = arith.constant 0 : index
    %238 = vector.load %arg8[%c18_151, %c0_152] : memref<24x64xf32, #tpu.memory_space<vmem>>, vector<1x64xf32>
    tpu.vector_store %arg8[%c18_151, %c0_152], %237 {strides = array<i32>} : memref<24x64xf32, #tpu.memory_space<vmem>>, vector<1x64xf32>,
    %c43 = arith.constant 43 : index
    %239 = memref.load %arg1[%c43] : memref<96xi32, #tpu.memory_space<smem>>
    %240 = arith.index_cast %239 : i32 to index
    %c0_153 = arith.constant 0 : index
    %241 = vector.load %arg6[%240, %c0_153] : memref<40x64xf32, #tpu.memory_space<vmem>>, vector<1x64xf32>
    %c19_154 = arith.constant 19 : index
    %c0_155 = arith.constant 0 : index
    %242 = vector.load %arg8[%c19_154, %c0_155] : memref<24x64xf32, #tpu.memory_space<vmem>>, vector<1x64xf32>
    tpu.vector_store %arg8[%c19_154, %c0_155], %241 {strides = array<i32>} : memref<24x64xf32, #tpu.memory_space<vmem>>, vector<1x64xf32>,
    %c44 = arith.constant 44 : index
    %243 = memref.load %arg1[%c44] : memref<96xi32, #tpu.memory_space<smem>>
    %244 = arith.index_cast %243 : i32 to index
    %c0_156 = arith.constant 0 : index
    %245 = vector.load %arg6[%244, %c0_156] : memref<40x64xf32, #tpu.memory_space<vmem>>, vector<1x64xf32>
    %c20_157 = arith.constant 20 : index
    %c0_158 = arith.constant 0 : index
    %246 = vector.load %arg8[%c20_157, %c0_158] : memref<24x64xf32, #tpu.memory_space<vmem>>, vector<1x64xf32>
    tpu.vector_store %arg8[%c20_157, %c0_158], %245 {strides = array<i32>} : memref<24x64xf32, #tpu.memory_space<vmem>>, vector<1x64xf32>,
    %c45 = arith.constant 45 : index
    %247 = memref.load %arg1[%c45] : memref<96xi32, #tpu.memory_space<smem>>
    %248 = arith.index_cast %247 : i32 to index
    %c0_159 = arith.constant 0 : index
    %249 = vector.load %arg6[%248, %c0_159] : memref<40x64xf32, #tpu.memory_space<vmem>>, vector<1x64xf32>
    %c21_160 = arith.constant 21 : index
    %c0_161 = arith.constant 0 : index
    %250 = vector.load %arg8[%c21_160, %c0_161] : memref<24x64xf32, #tpu.memory_space<vmem>>, vector<1x64xf32>
    tpu.vector_store %arg8[%c21_160, %c0_161], %249 {strides = array<i32>} : memref<24x64xf32, #tpu.memory_space<vmem>>, vector<1x64xf32>,
    %c46 = arith.constant 46 : index
    %251 = memref.load %arg1[%c46] : memref<96xi32, #tpu.memory_space<smem>>
    %252 = arith.index_cast %251 : i32 to index
    %c0_162 = arith.constant 0 : index
    %253 = vector.load %arg6[%252, %c0_162] : memref<40x64xf32, #tpu.memory_space<vmem>>, vector<1x64xf32>
    %c22_163 = arith.constant 22 : index
    %c0_164 = arith.constant 0 : index
    %254 = vector.load %arg8[%c22_163, %c0_164] : memref<24x64xf32, #tpu.memory_space<vmem>>, vector<1x64xf32>
    tpu.vector_store %arg8[%c22_163, %c0_164], %253 {strides = array<i32>} : memref<24x64xf32, #tpu.memory_space<vmem>>, vector<1x64xf32>,
    %c47 = arith.constant 47 : index
    %255 = memref.load %arg1[%c47] : memref<96xi32, #tpu.memory_space<smem>>
    %256 = arith.index_cast %255 : i32 to index
    %c0_165 = arith.constant 0 : index
    %257 = vector.load %arg6[%256, %c0_165] : memref<40x64xf32, #tpu.memory_space<vmem>>, vector<1x64xf32>
    %c23_166 = arith.constant 23 : index
    %c0_167 = arith.constant 0 : index
    %258 = vector.load %arg8[%c23_166, %c0_167] : memref<24x64xf32, #tpu.memory_space<vmem>>, vector<1x64xf32>
    tpu.vector_store %arg8[%c23_166, %c0_167], %257 {strides = array<i32>} : memref<24x64xf32, #tpu.memory_space<vmem>>, vector<1x64xf32>,
    %c0_168 = arith.constant 0 : index
    %c0_169 = arith.constant 0 : index
    %259 = vector.load %arg8[%c0_168, %c0_169] : memref<24x64xf32, #tpu.memory_space<vmem>>, vector<24x64xf32>
    %260 = vector.extract_strided_slice %259 {offsets = [0, 32], sizes = [24, 32], strides = [1, 1]} : vector<24x64xf32> to vector<24x32xf32>
    %cst_170 = arith.constant dense<0.000000e+00> : vector<24x128xf32>
    %261 = tpu.matmul %260, %9, %cst_170 {dimension_numbers = #tpu.dot_dimension_numbers<[1], [0], [0], [1], [0, 0, 1, 1], [], []>} : vector<24x32xf32>, vector<32x128xf32>, vector<24x128xf32> -> vector<24x128xf32>
    %c8_171 = arith.constant 8 : index
    %c0_172 = arith.constant 0 : index
    %262 = vector.load %arg7[%c8_171, %c0_172] : memref<32x128xf32, #tpu.memory_space<vmem>>, vector<8x128xf32>
    %263 = vector.extract_strided_slice %262 {offsets = [0, 96], sizes = [8, 32], strides = [1, 1]} : vector<8x128xf32> to vector<8x32xf32>
    %264 = vector.extract_strided_slice %261 {offsets = [0, 0], sizes = [8, 96], strides = [1, 1]} : vector<24x128xf32> to vector<8x96xf32>
    %265 = vector.extract_strided_slice %261 {offsets = [0, 96], sizes = [8, 32], strides = [1, 1]} : vector<24x128xf32> to vector<8x32xf32>
    %266 = arith.addf %265, %263 : vector<8x32xf32>
    %267 = arith.negf %266 : vector<8x32xf32>
    %268 = math.exp %267 : vector<8x32xf32>
    %cst_173 = arith.constant 1.000000e+00 : f32
    %269 = vector.broadcast %cst_173 : f32 to vector<8x32xf32>
    %270 = arith.addf %269, %268 : vector<8x32xf32>
    %271 = arith.divf %269, %270 : vector<8x32xf32>
    %272 = vector.extract_strided_slice %259 {offsets = [0, 0], sizes = [8, 32], strides = [1, 1]} : vector<24x64xf32> to vector<8x32xf32>
    %273 = arith.mulf %271, %272 : vector<8x32xf32>
    %274 = vector.extract_strided_slice %261 {offsets = [8, 0], sizes = [8, 96], strides = [1, 1]} : vector<24x128xf32> to vector<8x96xf32>
    %275 = arith.addf %264, %274 : vector<8x96xf32>
    %276 = vector.extract_strided_slice %261 {offsets = [8, 96], sizes = [8, 32], strides = [1, 1]} : vector<24x128xf32> to vector<8x32xf32>
    %277 = arith.addf %276, %263 : vector<8x32xf32>
    %278 = arith.negf %277 : vector<8x32xf32>
    %279 = math.exp %278 : vector<8x32xf32>
    %cst_174 = arith.constant 1.000000e+00 : f32
    %280 = vector.broadcast %cst_174 : f32 to vector<8x32xf32>
    %281 = arith.addf %280, %279 : vector<8x32xf32>
    %282 = arith.divf %280, %281 : vector<8x32xf32>
    %283 = vector.extract_strided_slice %259 {offsets = [8, 0], sizes = [8, 32], strides = [1, 1]} : vector<24x64xf32> to vector<8x32xf32>
    %284 = arith.mulf %282, %283 : vector<8x32xf32>
    %285 = arith.addf %273, %284 : vector<8x32xf32>
    %286 = vector.extract_strided_slice %261 {offsets = [16, 0], sizes = [8, 96], strides = [1, 1]} : vector<24x128xf32> to vector<8x96xf32>
    %287 = arith.addf %275, %286 : vector<8x96xf32>
    %288 = vector.extract_strided_slice %261 {offsets = [16, 96], sizes = [8, 32], strides = [1, 1]} : vector<24x128xf32> to vector<8x32xf32>
    %289 = arith.addf %288, %263 : vector<8x32xf32>
    %290 = arith.negf %289 : vector<8x32xf32>
    %291 = math.exp %290 : vector<8x32xf32>
    %cst_175 = arith.constant 1.000000e+00 : f32
    %292 = vector.broadcast %cst_175 : f32 to vector<8x32xf32>
    %293 = arith.addf %292, %291 : vector<8x32xf32>
    %294 = arith.divf %292, %293 : vector<8x32xf32>
    %295 = vector.extract_strided_slice %259 {offsets = [16, 0], sizes = [8, 32], strides = [1, 1]} : vector<24x64xf32> to vector<8x32xf32>
    %296 = arith.mulf %294, %295 : vector<8x32xf32>
    %297 = arith.addf %285, %296 : vector<8x32xf32>
    %298 = vector.extract_strided_slice %262 {offsets = [0, 0], sizes = [8, 96], strides = [1, 1]} : vector<8x128xf32> to vector<8x96xf32>
    %299 = arith.addf %298, %287 : vector<8x96xf32>
    %300 = vector.extract_strided_slice %299 {offsets = [0, 0], sizes = [8, 64], strides = [1, 1]} : vector<8x96xf32> to vector<8x64xf32>
    %301 = arith.negf %300 : vector<8x64xf32>
    %302 = math.exp %301 : vector<8x64xf32>
    %cst_176 = arith.constant 1.000000e+00 : f32
    %303 = vector.broadcast %cst_176 : f32 to vector<8x64xf32>
    %304 = arith.addf %303, %302 : vector<8x64xf32>
    %305 = arith.divf %303, %304 : vector<8x64xf32>
    %306 = vector.extract_strided_slice %305 {offsets = [0, 0], sizes = [8, 32], strides = [1, 1]} : vector<8x64xf32> to vector<8x32xf32>
    %307 = vector.extract_strided_slice %305 {offsets = [0, 32], sizes = [8, 32], strides = [1, 1]} : vector<8x64xf32> to vector<8x32xf32>
    %308 = vector.extract_strided_slice %299 {offsets = [0, 64], sizes = [8, 32], strides = [1, 1]} : vector<8x96xf32> to vector<8x32xf32>
    %309 = math.tanh %308 : vector<8x32xf32>
    %310 = arith.mulf %306, %309 : vector<8x32xf32>
    %311 = arith.addf %310, %297 : vector<8x32xf32>
    %312 = math.tanh %311 : vector<8x32xf32>
    %313 = arith.mulf %307, %312 : vector<8x32xf32>
    %314 = tpu.concatenate %311, %313 in 1 : vector<8x32xf32>, vector<8x32xf32> -> vector<8x64xf32>
    %c8_177 = arith.constant 8 : index
    %c0_178 = arith.constant 0 : index
    %315 = vector.load %arg6[%c8_177, %c0_178] : memref<40x64xf32, #tpu.memory_space<vmem>>, vector<8x64xf32>
    tpu.vector_store %arg6[%c8_177, %c0_178], %314 {strides = array<i32>} : memref<40x64xf32, #tpu.memory_space<vmem>>, vector<8x64xf32>,
    %c48 = arith.constant 48 : index
    %316 = memref.load %arg1[%c48] : memref<96xi32, #tpu.memory_space<smem>>
    %317 = arith.index_cast %316 : i32 to index
    %c0_179 = arith.constant 0 : index
    %318 = vector.load %arg6[%317, %c0_179] : memref<40x64xf32, #tpu.memory_space<vmem>>, vector<1x64xf32>
    %c0_180 = arith.constant 0 : index
    %c0_181 = arith.constant 0 : index
    %319 = vector.load %arg8[%c0_180, %c0_181] : memref<24x64xf32, #tpu.memory_space<vmem>>, vector<1x64xf32>
    tpu.vector_store %arg8[%c0_180, %c0_181], %318 {strides = array<i32>} : memref<24x64xf32, #tpu.memory_space<vmem>>, vector<1x64xf32>,
    %c49 = arith.constant 49 : index
    %320 = memref.load %arg1[%c49] : memref<96xi32, #tpu.memory_space<smem>>
    %321 = arith.index_cast %320 : i32 to index
    %c0_182 = arith.constant 0 : index
    %322 = vector.load %arg6[%321, %c0_182] : memref<40x64xf32, #tpu.memory_space<vmem>>, vector<1x64xf32>
    %c1_183 = arith.constant 1 : index
    %c0_184 = arith.constant 0 : index
    %323 = vector.load %arg8[%c1_183, %c0_184] : memref<24x64xf32, #tpu.memory_space<vmem>>, vector<1x64xf32>
    tpu.vector_store %arg8[%c1_183, %c0_184], %322 {strides = array<i32>} : memref<24x64xf32, #tpu.memory_space<vmem>>, vector<1x64xf32>,
    %c50 = arith.constant 50 : index
    %324 = memref.load %arg1[%c50] : memref<96xi32, #tpu.memory_space<smem>>
    %325 = arith.index_cast %324 : i32 to index
    %c0_185 = arith.constant 0 : index
    %326 = vector.load %arg6[%325, %c0_185] : memref<40x64xf32, #tpu.memory_space<vmem>>, vector<1x64xf32>
    %c2_186 = arith.constant 2 : index
    %c0_187 = arith.constant 0 : index
    %327 = vector.load %arg8[%c2_186, %c0_187] : memref<24x64xf32, #tpu.memory_space<vmem>>, vector<1x64xf32>
    tpu.vector_store %arg8[%c2_186, %c0_187], %326 {strides = array<i32>} : memref<24x64xf32, #tpu.memory_space<vmem>>, vector<1x64xf32>,
    %c51 = arith.constant 51 : index
    %328 = memref.load %arg1[%c51] : memref<96xi32, #tpu.memory_space<smem>>
    %329 = arith.index_cast %328 : i32 to index
    %c0_188 = arith.constant 0 : index
    %330 = vector.load %arg6[%329, %c0_188] : memref<40x64xf32, #tpu.memory_space<vmem>>, vector<1x64xf32>
    %c3_189 = arith.constant 3 : index
    %c0_190 = arith.constant 0 : index
    %331 = vector.load %arg8[%c3_189, %c0_190] : memref<24x64xf32, #tpu.memory_space<vmem>>, vector<1x64xf32>
    tpu.vector_store %arg8[%c3_189, %c0_190], %330 {strides = array<i32>} : memref<24x64xf32, #tpu.memory_space<vmem>>, vector<1x64xf32>,
    %c52 = arith.constant 52 : index
    %332 = memref.load %arg1[%c52] : memref<96xi32, #tpu.memory_space<smem>>
    %333 = arith.index_cast %332 : i32 to index
    %c0_191 = arith.constant 0 : index
    %334 = vector.load %arg6[%333, %c0_191] : memref<40x64xf32, #tpu.memory_space<vmem>>, vector<1x64xf32>
    %c4_192 = arith.constant 4 : index
    %c0_193 = arith.constant 0 : index
    %335 = vector.load %arg8[%c4_192, %c0_193] : memref<24x64xf32, #tpu.memory_space<vmem>>, vector<1x64xf32>
    tpu.vector_store %arg8[%c4_192, %c0_193], %334 {strides = array<i32>} : memref<24x64xf32, #tpu.memory_space<vmem>>, vector<1x64xf32>,
    %c53 = arith.constant 53 : index
    %336 = memref.load %arg1[%c53] : memref<96xi32, #tpu.memory_space<smem>>
    %337 = arith.index_cast %336 : i32 to index
    %c0_194 = arith.constant 0 : index
    %338 = vector.load %arg6[%337, %c0_194] : memref<40x64xf32, #tpu.memory_space<vmem>>, vector<1x64xf32>
    %c5_195 = arith.constant 5 : index
    %c0_196 = arith.constant 0 : index
    %339 = vector.load %arg8[%c5_195, %c0_196] : memref<24x64xf32, #tpu.memory_space<vmem>>, vector<1x64xf32>
    tpu.vector_store %arg8[%c5_195, %c0_196], %338 {strides = array<i32>} : memref<24x64xf32, #tpu.memory_space<vmem>>, vector<1x64xf32>,
    %c54 = arith.constant 54 : index
    %340 = memref.load %arg1[%c54] : memref<96xi32, #tpu.memory_space<smem>>
    %341 = arith.index_cast %340 : i32 to index
    %c0_197 = arith.constant 0 : index
    %342 = vector.load %arg6[%341, %c0_197] : memref<40x64xf32, #tpu.memory_space<vmem>>, vector<1x64xf32>
    %c6_198 = arith.constant 6 : index
    %c0_199 = arith.constant 0 : index
    %343 = vector.load %arg8[%c6_198, %c0_199] : memref<24x64xf32, #tpu.memory_space<vmem>>, vector<1x64xf32>
    tpu.vector_store %arg8[%c6_198, %c0_199], %342 {strides = array<i32>} : memref<24x64xf32, #tpu.memory_space<vmem>>, vector<1x64xf32>,
    %c55 = arith.constant 55 : index
    %344 = memref.load %arg1[%c55] : memref<96xi32, #tpu.memory_space<smem>>
    %345 = arith.index_cast %344 : i32 to index
    %c0_200 = arith.constant 0 : index
    %346 = vector.load %arg6[%345, %c0_200] : memref<40x64xf32, #tpu.memory_space<vmem>>, vector<1x64xf32>
    %c7_201 = arith.constant 7 : index
    %c0_202 = arith.constant 0 : index
    %347 = vector.load %arg8[%c7_201, %c0_202] : memref<24x64xf32, #tpu.memory_space<vmem>>, vector<1x64xf32>
    tpu.vector_store %arg8[%c7_201, %c0_202], %346 {strides = array<i32>} : memref<24x64xf32, #tpu.memory_space<vmem>>, vector<1x64xf32>,
    %c56 = arith.constant 56 : index
    %348 = memref.load %arg1[%c56] : memref<96xi32, #tpu.memory_space<smem>>
    %349 = arith.index_cast %348 : i32 to index
    %c0_203 = arith.constant 0 : index
    %350 = vector.load %arg6[%349, %c0_203] : memref<40x64xf32, #tpu.memory_space<vmem>>, vector<1x64xf32>
    %c8_204 = arith.constant 8 : index
    %c0_205 = arith.constant 0 : index
    %351 = vector.load %arg8[%c8_204, %c0_205] : memref<24x64xf32, #tpu.memory_space<vmem>>, vector<1x64xf32>
    tpu.vector_store %arg8[%c8_204, %c0_205], %350 {strides = array<i32>} : memref<24x64xf32, #tpu.memory_space<vmem>>, vector<1x64xf32>,
    %c57 = arith.constant 57 : index
    %352 = memref.load %arg1[%c57] : memref<96xi32, #tpu.memory_space<smem>>
    %353 = arith.index_cast %352 : i32 to index
    %c0_206 = arith.constant 0 : index
    %354 = vector.load %arg6[%353, %c0_206] : memref<40x64xf32, #tpu.memory_space<vmem>>, vector<1x64xf32>
    %c9_207 = arith.constant 9 : index
    %c0_208 = arith.constant 0 : index
    %355 = vector.load %arg8[%c9_207, %c0_208] : memref<24x64xf32, #tpu.memory_space<vmem>>, vector<1x64xf32>
    tpu.vector_store %arg8[%c9_207, %c0_208], %354 {strides = array<i32>} : memref<24x64xf32, #tpu.memory_space<vmem>>, vector<1x64xf32>,
    %c58 = arith.constant 58 : index
    %356 = memref.load %arg1[%c58] : memref<96xi32, #tpu.memory_space<smem>>
    %357 = arith.index_cast %356 : i32 to index
    %c0_209 = arith.constant 0 : index
    %358 = vector.load %arg6[%357, %c0_209] : memref<40x64xf32, #tpu.memory_space<vmem>>, vector<1x64xf32>
    %c10_210 = arith.constant 10 : index
    %c0_211 = arith.constant 0 : index
    %359 = vector.load %arg8[%c10_210, %c0_211] : memref<24x64xf32, #tpu.memory_space<vmem>>, vector<1x64xf32>
    tpu.vector_store %arg8[%c10_210, %c0_211], %358 {strides = array<i32>} : memref<24x64xf32, #tpu.memory_space<vmem>>, vector<1x64xf32>,
    %c59 = arith.constant 59 : index
    %360 = memref.load %arg1[%c59] : memref<96xi32, #tpu.memory_space<smem>>
    %361 = arith.index_cast %360 : i32 to index
    %c0_212 = arith.constant 0 : index
    %362 = vector.load %arg6[%361, %c0_212] : memref<40x64xf32, #tpu.memory_space<vmem>>, vector<1x64xf32>
    %c11_213 = arith.constant 11 : index
    %c0_214 = arith.constant 0 : index
    %363 = vector.load %arg8[%c11_213, %c0_214] : memref<24x64xf32, #tpu.memory_space<vmem>>, vector<1x64xf32>
    tpu.vector_store %arg8[%c11_213, %c0_214], %362 {strides = array<i32>} : memref<24x64xf32, #tpu.memory_space<vmem>>, vector<1x64xf32>,
    %c60 = arith.constant 60 : index
    %364 = memref.load %arg1[%c60] : memref<96xi32, #tpu.memory_space<smem>>
    %365 = arith.index_cast %364 : i32 to index
    %c0_215 = arith.constant 0 : index
    %366 = vector.load %arg6[%365, %c0_215] : memref<40x64xf32, #tpu.memory_space<vmem>>, vector<1x64xf32>
    %c12_216 = arith.constant 12 : index
    %c0_217 = arith.constant 0 : index
    %367 = vector.load %arg8[%c12_216, %c0_217] : memref<24x64xf32, #tpu.memory_space<vmem>>, vector<1x64xf32>
    tpu.vector_store %arg8[%c12_216, %c0_217], %366 {strides = array<i32>} : memref<24x64xf32, #tpu.memory_space<vmem>>, vector<1x64xf32>,
    %c61 = arith.constant 61 : index
    %368 = memref.load %arg1[%c61] : memref<96xi32, #tpu.memory_space<smem>>
    %369 = arith.index_cast %368 : i32 to index
    %c0_218 = arith.constant 0 : index
    %370 = vector.load %arg6[%369, %c0_218] : memref<40x64xf32, #tpu.memory_space<vmem>>, vector<1x64xf32>
    %c13_219 = arith.constant 13 : index
    %c0_220 = arith.constant 0 : index
    %371 = vector.load %arg8[%c13_219, %c0_220] : memref<24x64xf32, #tpu.memory_space<vmem>>, vector<1x64xf32>
    tpu.vector_store %arg8[%c13_219, %c0_220], %370 {strides = array<i32>} : memref<24x64xf32, #tpu.memory_space<vmem>>, vector<1x64xf32>,
    %c62 = arith.constant 62 : index
    %372 = memref.load %arg1[%c62] : memref<96xi32, #tpu.memory_space<smem>>
    %373 = arith.index_cast %372 : i32 to index
    %c0_221 = arith.constant 0 : index
    %374 = vector.load %arg6[%373, %c0_221] : memref<40x64xf32, #tpu.memory_space<vmem>>, vector<1x64xf32>
    %c14_222 = arith.constant 14 : index
    %c0_223 = arith.constant 0 : index
    %375 = vector.load %arg8[%c14_222, %c0_223] : memref<24x64xf32, #tpu.memory_space<vmem>>, vector<1x64xf32>
    tpu.vector_store %arg8[%c14_222, %c0_223], %374 {strides = array<i32>} : memref<24x64xf32, #tpu.memory_space<vmem>>, vector<1x64xf32>,
    %c63 = arith.constant 63 : index
    %376 = memref.load %arg1[%c63] : memref<96xi32, #tpu.memory_space<smem>>
    %377 = arith.index_cast %376 : i32 to index
    %c0_224 = arith.constant 0 : index
    %378 = vector.load %arg6[%377, %c0_224] : memref<40x64xf32, #tpu.memory_space<vmem>>, vector<1x64xf32>
    %c15_225 = arith.constant 15 : index
    %c0_226 = arith.constant 0 : index
    %379 = vector.load %arg8[%c15_225, %c0_226] : memref<24x64xf32, #tpu.memory_space<vmem>>, vector<1x64xf32>
    tpu.vector_store %arg8[%c15_225, %c0_226], %378 {strides = array<i32>} : memref<24x64xf32, #tpu.memory_space<vmem>>, vector<1x64xf32>,
    %c64 = arith.constant 64 : index
    %380 = memref.load %arg1[%c64] : memref<96xi32, #tpu.memory_space<smem>>
    %381 = arith.index_cast %380 : i32 to index
    %c0_227 = arith.constant 0 : index
    %382 = vector.load %arg6[%381, %c0_227] : memref<40x64xf32, #tpu.memory_space<vmem>>, vector<1x64xf32>
    %c16_228 = arith.constant 16 : index
    %c0_229 = arith.constant 0 : index
    %383 = vector.load %arg8[%c16_228, %c0_229] : memref<24x64xf32, #tpu.memory_space<vmem>>, vector<1x64xf32>
    tpu.vector_store %arg8[%c16_228, %c0_229], %382 {strides = array<i32>} : memref<24x64xf32, #tpu.memory_space<vmem>>, vector<1x64xf32>,
    %c65 = arith.constant 65 : index
    %384 = memref.load %arg1[%c65] : memref<96xi32, #tpu.memory_space<smem>>
    %385 = arith.index_cast %384 : i32 to index
    %c0_230 = arith.constant 0 : index
    %386 = vector.load %arg6[%385, %c0_230] : memref<40x64xf32, #tpu.memory_space<vmem>>, vector<1x64xf32>
    %c17_231 = arith.constant 17 : index
    %c0_232 = arith.constant 0 : index
    %387 = vector.load %arg8[%c17_231, %c0_232] : memref<24x64xf32, #tpu.memory_space<vmem>>, vector<1x64xf32>
    tpu.vector_store %arg8[%c17_231, %c0_232], %386 {strides = array<i32>} : memref<24x64xf32, #tpu.memory_space<vmem>>, vector<1x64xf32>,
    %c66 = arith.constant 66 : index
    %388 = memref.load %arg1[%c66] : memref<96xi32, #tpu.memory_space<smem>>
    %389 = arith.index_cast %388 : i32 to index
    %c0_233 = arith.constant 0 : index
    %390 = vector.load %arg6[%389, %c0_233] : memref<40x64xf32, #tpu.memory_space<vmem>>, vector<1x64xf32>
    %c18_234 = arith.constant 18 : index
    %c0_235 = arith.constant 0 : index
    %391 = vector.load %arg8[%c18_234, %c0_235] : memref<24x64xf32, #tpu.memory_space<vmem>>, vector<1x64xf32>
    tpu.vector_store %arg8[%c18_234, %c0_235], %390 {strides = array<i32>} : memref<24x64xf32, #tpu.memory_space<vmem>>, vector<1x64xf32>,
    %c67 = arith.constant 67 : index
    %392 = memref.load %arg1[%c67] : memref<96xi32, #tpu.memory_space<smem>>
    %393 = arith.index_cast %392 : i32 to index
    %c0_236 = arith.constant 0 : index
    %394 = vector.load %arg6[%393, %c0_236] : memref<40x64xf32, #tpu.memory_space<vmem>>, vector<1x64xf32>
    %c19_237 = arith.constant 19 : index
    %c0_238 = arith.constant 0 : index
    %395 = vector.load %arg8[%c19_237, %c0_238] : memref<24x64xf32, #tpu.memory_space<vmem>>, vector<1x64xf32>
    tpu.vector_store %arg8[%c19_237, %c0_238], %394 {strides = array<i32>} : memref<24x64xf32, #tpu.memory_space<vmem>>, vector<1x64xf32>,
    %c68 = arith.constant 68 : index
    %396 = memref.load %arg1[%c68] : memref<96xi32, #tpu.memory_space<smem>>
    %397 = arith.index_cast %396 : i32 to index
    %c0_239 = arith.constant 0 : index
    %398 = vector.load %arg6[%397, %c0_239] : memref<40x64xf32, #tpu.memory_space<vmem>>, vector<1x64xf32>
    %c20_240 = arith.constant 20 : index
    %c0_241 = arith.constant 0 : index
    %399 = vector.load %arg8[%c20_240, %c0_241] : memref<24x64xf32, #tpu.memory_space<vmem>>, vector<1x64xf32>
    tpu.vector_store %arg8[%c20_240, %c0_241], %398 {strides = array<i32>} : memref<24x64xf32, #tpu.memory_space<vmem>>, vector<1x64xf32>,
    %c69 = arith.constant 69 : index
    %400 = memref.load %arg1[%c69] : memref<96xi32, #tpu.memory_space<smem>>
    %401 = arith.index_cast %400 : i32 to index
    %c0_242 = arith.constant 0 : index
    %402 = vector.load %arg6[%401, %c0_242] : memref<40x64xf32, #tpu.memory_space<vmem>>, vector<1x64xf32>
    %c21_243 = arith.constant 21 : index
    %c0_244 = arith.constant 0 : index
    %403 = vector.load %arg8[%c21_243, %c0_244] : memref<24x64xf32, #tpu.memory_space<vmem>>, vector<1x64xf32>
    tpu.vector_store %arg8[%c21_243, %c0_244], %402 {strides = array<i32>} : memref<24x64xf32, #tpu.memory_space<vmem>>, vector<1x64xf32>,
    %c70 = arith.constant 70 : index
    %404 = memref.load %arg1[%c70] : memref<96xi32, #tpu.memory_space<smem>>
    %405 = arith.index_cast %404 : i32 to index
    %c0_245 = arith.constant 0 : index
    %406 = vector.load %arg6[%405, %c0_245] : memref<40x64xf32, #tpu.memory_space<vmem>>, vector<1x64xf32>
    %c22_246 = arith.constant 22 : index
    %c0_247 = arith.constant 0 : index
    %407 = vector.load %arg8[%c22_246, %c0_247] : memref<24x64xf32, #tpu.memory_space<vmem>>, vector<1x64xf32>
    tpu.vector_store %arg8[%c22_246, %c0_247], %406 {strides = array<i32>} : memref<24x64xf32, #tpu.memory_space<vmem>>, vector<1x64xf32>,
    %c71 = arith.constant 71 : index
    %408 = memref.load %arg1[%c71] : memref<96xi32, #tpu.memory_space<smem>>
    %409 = arith.index_cast %408 : i32 to index
    %c0_248 = arith.constant 0 : index
    %410 = vector.load %arg6[%409, %c0_248] : memref<40x64xf32, #tpu.memory_space<vmem>>, vector<1x64xf32>
    %c23_249 = arith.constant 23 : index
    %c0_250 = arith.constant 0 : index
    %411 = vector.load %arg8[%c23_249, %c0_250] : memref<24x64xf32, #tpu.memory_space<vmem>>, vector<1x64xf32>
    tpu.vector_store %arg8[%c23_249, %c0_250], %410 {strides = array<i32>} : memref<24x64xf32, #tpu.memory_space<vmem>>, vector<1x64xf32>,
    %c0_251 = arith.constant 0 : index
    %c0_252 = arith.constant 0 : index
    %412 = vector.load %arg8[%c0_251, %c0_252] : memref<24x64xf32, #tpu.memory_space<vmem>>, vector<24x64xf32>
    %413 = vector.extract_strided_slice %412 {offsets = [0, 32], sizes = [24, 32], strides = [1, 1]} : vector<24x64xf32> to vector<24x32xf32>
    %cst_253 = arith.constant dense<0.000000e+00> : vector<24x128xf32>
    %414 = tpu.matmul %413, %9, %cst_253 {dimension_numbers = #tpu.dot_dimension_numbers<[1], [0], [0], [1], [0, 0, 1, 1], [], []>} : vector<24x32xf32>, vector<32x128xf32>, vector<24x128xf32> -> vector<24x128xf32>
    %c16_254 = arith.constant 16 : index
    %c0_255 = arith.constant 0 : index
    %415 = vector.load %arg7[%c16_254, %c0_255] : memref<32x128xf32, #tpu.memory_space<vmem>>, vector<8x128xf32>
    %416 = vector.extract_strided_slice %415 {offsets = [0, 96], sizes = [8, 32], strides = [1, 1]} : vector<8x128xf32> to vector<8x32xf32>
    %417 = vector.extract_strided_slice %414 {offsets = [0, 0], sizes = [8, 96], strides = [1, 1]} : vector<24x128xf32> to vector<8x96xf32>
    %418 = vector.extract_strided_slice %414 {offsets = [0, 96], sizes = [8, 32], strides = [1, 1]} : vector<24x128xf32> to vector<8x32xf32>
    %419 = arith.addf %418, %416 : vector<8x32xf32>
    %420 = arith.negf %419 : vector<8x32xf32>
    %421 = math.exp %420 : vector<8x32xf32>
    %cst_256 = arith.constant 1.000000e+00 : f32
    %422 = vector.broadcast %cst_256 : f32 to vector<8x32xf32>
    %423 = arith.addf %422, %421 : vector<8x32xf32>
    %424 = arith.divf %422, %423 : vector<8x32xf32>
    %425 = vector.extract_strided_slice %412 {offsets = [0, 0], sizes = [8, 32], strides = [1, 1]} : vector<24x64xf32> to vector<8x32xf32>
    %426 = arith.mulf %424, %425 : vector<8x32xf32>
    %427 = vector.extract_strided_slice %414 {offsets = [8, 0], sizes = [8, 96], strides = [1, 1]} : vector<24x128xf32> to vector<8x96xf32>
    %428 = arith.addf %417, %427 : vector<8x96xf32>
    %429 = vector.extract_strided_slice %414 {offsets = [8, 96], sizes = [8, 32], strides = [1, 1]} : vector<24x128xf32> to vector<8x32xf32>
    %430 = arith.addf %429, %416 : vector<8x32xf32>
    %431 = arith.negf %430 : vector<8x32xf32>
    %432 = math.exp %431 : vector<8x32xf32>
    %cst_257 = arith.constant 1.000000e+00 : f32
    %433 = vector.broadcast %cst_257 : f32 to vector<8x32xf32>
    %434 = arith.addf %433, %432 : vector<8x32xf32>
    %435 = arith.divf %433, %434 : vector<8x32xf32>
    %436 = vector.extract_strided_slice %412 {offsets = [8, 0], sizes = [8, 32], strides = [1, 1]} : vector<24x64xf32> to vector<8x32xf32>
    %437 = arith.mulf %435, %436 : vector<8x32xf32>
    %438 = arith.addf %426, %437 : vector<8x32xf32>
    %439 = vector.extract_strided_slice %414 {offsets = [16, 0], sizes = [8, 96], strides = [1, 1]} : vector<24x128xf32> to vector<8x96xf32>
    %440 = arith.addf %428, %439 : vector<8x96xf32>
    %441 = vector.extract_strided_slice %414 {offsets = [16, 96], sizes = [8, 32], strides = [1, 1]} : vector<24x128xf32> to vector<8x32xf32>
    %442 = arith.addf %441, %416 : vector<8x32xf32>
    %443 = arith.negf %442 : vector<8x32xf32>
    %444 = math.exp %443 : vector<8x32xf32>
    %cst_258 = arith.constant 1.000000e+00 : f32
    %445 = vector.broadcast %cst_258 : f32 to vector<8x32xf32>
    %446 = arith.addf %445, %444 : vector<8x32xf32>
    %447 = arith.divf %445, %446 : vector<8x32xf32>
    %448 = vector.extract_strided_slice %412 {offsets = [16, 0], sizes = [8, 32], strides = [1, 1]} : vector<24x64xf32> to vector<8x32xf32>
    %449 = arith.mulf %447, %448 : vector<8x32xf32>
    %450 = arith.addf %438, %449 : vector<8x32xf32>
    %451 = vector.extract_strided_slice %415 {offsets = [0, 0], sizes = [8, 96], strides = [1, 1]} : vector<8x128xf32> to vector<8x96xf32>
    %452 = arith.addf %451, %440 : vector<8x96xf32>
    %453 = vector.extract_strided_slice %452 {offsets = [0, 0], sizes = [8, 64], strides = [1, 1]} : vector<8x96xf32> to vector<8x64xf32>
    %454 = arith.negf %453 : vector<8x64xf32>
    %455 = math.exp %454 : vector<8x64xf32>
    %cst_259 = arith.constant 1.000000e+00 : f32
    %456 = vector.broadcast %cst_259 : f32 to vector<8x64xf32>
    %457 = arith.addf %456, %455 : vector<8x64xf32>
    %458 = arith.divf %456, %457 : vector<8x64xf32>
    %459 = vector.extract_strided_slice %458 {offsets = [0, 0], sizes = [8, 32], strides = [1, 1]} : vector<8x64xf32> to vector<8x32xf32>
    %460 = vector.extract_strided_slice %458 {offsets = [0, 32], sizes = [8, 32], strides = [1, 1]} : vector<8x64xf32> to vector<8x32xf32>
    %461 = vector.extract_strided_slice %452 {offsets = [0, 64], sizes = [8, 32], strides = [1, 1]} : vector<8x96xf32> to vector<8x32xf32>
    %462 = math.tanh %461 : vector<8x32xf32>
    %463 = arith.mulf %459, %462 : vector<8x32xf32>
    %464 = arith.addf %463, %450 : vector<8x32xf32>
    %465 = math.tanh %464 : vector<8x32xf32>
    %466 = arith.mulf %460, %465 : vector<8x32xf32>
    %467 = tpu.concatenate %464, %466 in 1 : vector<8x32xf32>, vector<8x32xf32> -> vector<8x64xf32>
    %c16_260 = arith.constant 16 : index
    %c0_261 = arith.constant 0 : index
    %468 = vector.load %arg6[%c16_260, %c0_261] : memref<40x64xf32, #tpu.memory_space<vmem>>, vector<8x64xf32>
    tpu.vector_store %arg6[%c16_260, %c0_261], %467 {strides = array<i32>} : memref<40x64xf32, #tpu.memory_space<vmem>>, vector<8x64xf32>,
    %c72 = arith.constant 72 : index
    %469 = memref.load %arg1[%c72] : memref<96xi32, #tpu.memory_space<smem>>
    %470 = arith.index_cast %469 : i32 to index
    %c0_262 = arith.constant 0 : index
    %471 = vector.load %arg6[%470, %c0_262] : memref<40x64xf32, #tpu.memory_space<vmem>>, vector<1x64xf32>
    %c0_263 = arith.constant 0 : index
    %c0_264 = arith.constant 0 : index
    %472 = vector.load %arg8[%c0_263, %c0_264] : memref<24x64xf32, #tpu.memory_space<vmem>>, vector<1x64xf32>
    tpu.vector_store %arg8[%c0_263, %c0_264], %471 {strides = array<i32>} : memref<24x64xf32, #tpu.memory_space<vmem>>, vector<1x64xf32>,
    %c73 = arith.constant 73 : index
    %473 = memref.load %arg1[%c73] : memref<96xi32, #tpu.memory_space<smem>>
    %474 = arith.index_cast %473 : i32 to index
    %c0_265 = arith.constant 0 : index
    %475 = vector.load %arg6[%474, %c0_265] : memref<40x64xf32, #tpu.memory_space<vmem>>, vector<1x64xf32>
    %c1_266 = arith.constant 1 : index
    %c0_267 = arith.constant 0 : index
    %476 = vector.load %arg8[%c1_266, %c0_267] : memref<24x64xf32, #tpu.memory_space<vmem>>, vector<1x64xf32>
    tpu.vector_store %arg8[%c1_266, %c0_267], %475 {strides = array<i32>} : memref<24x64xf32, #tpu.memory_space<vmem>>, vector<1x64xf32>,
    %c74 = arith.constant 74 : index
    %477 = memref.load %arg1[%c74] : memref<96xi32, #tpu.memory_space<smem>>
    %478 = arith.index_cast %477 : i32 to index
    %c0_268 = arith.constant 0 : index
    %479 = vector.load %arg6[%478, %c0_268] : memref<40x64xf32, #tpu.memory_space<vmem>>, vector<1x64xf32>
    %c2_269 = arith.constant 2 : index
    %c0_270 = arith.constant 0 : index
    %480 = vector.load %arg8[%c2_269, %c0_270] : memref<24x64xf32, #tpu.memory_space<vmem>>, vector<1x64xf32>
    tpu.vector_store %arg8[%c2_269, %c0_270], %479 {strides = array<i32>} : memref<24x64xf32, #tpu.memory_space<vmem>>, vector<1x64xf32>,
    %c75 = arith.constant 75 : index
    %481 = memref.load %arg1[%c75] : memref<96xi32, #tpu.memory_space<smem>>
    %482 = arith.index_cast %481 : i32 to index
    %c0_271 = arith.constant 0 : index
    %483 = vector.load %arg6[%482, %c0_271] : memref<40x64xf32, #tpu.memory_space<vmem>>, vector<1x64xf32>
    %c3_272 = arith.constant 3 : index
    %c0_273 = arith.constant 0 : index
    %484 = vector.load %arg8[%c3_272, %c0_273] : memref<24x64xf32, #tpu.memory_space<vmem>>, vector<1x64xf32>
    tpu.vector_store %arg8[%c3_272, %c0_273], %483 {strides = array<i32>} : memref<24x64xf32, #tpu.memory_space<vmem>>, vector<1x64xf32>,
    %c76 = arith.constant 76 : index
    %485 = memref.load %arg1[%c76] : memref<96xi32, #tpu.memory_space<smem>>
    %486 = arith.index_cast %485 : i32 to index
    %c0_274 = arith.constant 0 : index
    %487 = vector.load %arg6[%486, %c0_274] : memref<40x64xf32, #tpu.memory_space<vmem>>, vector<1x64xf32>
    %c4_275 = arith.constant 4 : index
    %c0_276 = arith.constant 0 : index
    %488 = vector.load %arg8[%c4_275, %c0_276] : memref<24x64xf32, #tpu.memory_space<vmem>>, vector<1x64xf32>
    tpu.vector_store %arg8[%c4_275, %c0_276], %487 {strides = array<i32>} : memref<24x64xf32, #tpu.memory_space<vmem>>, vector<1x64xf32>,
    %c77 = arith.constant 77 : index
    %489 = memref.load %arg1[%c77] : memref<96xi32, #tpu.memory_space<smem>>
    %490 = arith.index_cast %489 : i32 to index
    %c0_277 = arith.constant 0 : index
    %491 = vector.load %arg6[%490, %c0_277] : memref<40x64xf32, #tpu.memory_space<vmem>>, vector<1x64xf32>
    %c5_278 = arith.constant 5 : index
    %c0_279 = arith.constant 0 : index
    %492 = vector.load %arg8[%c5_278, %c0_279] : memref<24x64xf32, #tpu.memory_space<vmem>>, vector<1x64xf32>
    tpu.vector_store %arg8[%c5_278, %c0_279], %491 {strides = array<i32>} : memref<24x64xf32, #tpu.memory_space<vmem>>, vector<1x64xf32>,
    %c78 = arith.constant 78 : index
    %493 = memref.load %arg1[%c78] : memref<96xi32, #tpu.memory_space<smem>>
    %494 = arith.index_cast %493 : i32 to index
    %c0_280 = arith.constant 0 : index
    %495 = vector.load %arg6[%494, %c0_280] : memref<40x64xf32, #tpu.memory_space<vmem>>, vector<1x64xf32>
    %c6_281 = arith.constant 6 : index
    %c0_282 = arith.constant 0 : index
    %496 = vector.load %arg8[%c6_281, %c0_282] : memref<24x64xf32, #tpu.memory_space<vmem>>, vector<1x64xf32>
    tpu.vector_store %arg8[%c6_281, %c0_282], %495 {strides = array<i32>} : memref<24x64xf32, #tpu.memory_space<vmem>>, vector<1x64xf32>,
    %c79 = arith.constant 79 : index
    %497 = memref.load %arg1[%c79] : memref<96xi32, #tpu.memory_space<smem>>
    %498 = arith.index_cast %497 : i32 to index
    %c0_283 = arith.constant 0 : index
    %499 = vector.load %arg6[%498, %c0_283] : memref<40x64xf32, #tpu.memory_space<vmem>>, vector<1x64xf32>
    %c7_284 = arith.constant 7 : index
    %c0_285 = arith.constant 0 : index
    %500 = vector.load %arg8[%c7_284, %c0_285] : memref<24x64xf32, #tpu.memory_space<vmem>>, vector<1x64xf32>
    tpu.vector_store %arg8[%c7_284, %c0_285], %499 {strides = array<i32>} : memref<24x64xf32, #tpu.memory_space<vmem>>, vector<1x64xf32>,
    %c80 = arith.constant 80 : index
    %501 = memref.load %arg1[%c80] : memref<96xi32, #tpu.memory_space<smem>>
    %502 = arith.index_cast %501 : i32 to index
    %c0_286 = arith.constant 0 : index
    %503 = vector.load %arg6[%502, %c0_286] : memref<40x64xf32, #tpu.memory_space<vmem>>, vector<1x64xf32>
    %c8_287 = arith.constant 8 : index
    %c0_288 = arith.constant 0 : index
    %504 = vector.load %arg8[%c8_287, %c0_288] : memref<24x64xf32, #tpu.memory_space<vmem>>, vector<1x64xf32>
    tpu.vector_store %arg8[%c8_287, %c0_288], %503 {strides = array<i32>} : memref<24x64xf32, #tpu.memory_space<vmem>>, vector<1x64xf32>,
    %c81 = arith.constant 81 : index
    %505 = memref.load %arg1[%c81] : memref<96xi32, #tpu.memory_space<smem>>
    %506 = arith.index_cast %505 : i32 to index
    %c0_289 = arith.constant 0 : index
    %507 = vector.load %arg6[%506, %c0_289] : memref<40x64xf32, #tpu.memory_space<vmem>>, vector<1x64xf32>
    %c9_290 = arith.constant 9 : index
    %c0_291 = arith.constant 0 : index
    %508 = vector.load %arg8[%c9_290, %c0_291] : memref<24x64xf32, #tpu.memory_space<vmem>>, vector<1x64xf32>
    tpu.vector_store %arg8[%c9_290, %c0_291], %507 {strides = array<i32>} : memref<24x64xf32, #tpu.memory_space<vmem>>, vector<1x64xf32>,
    %c82 = arith.constant 82 : index
    %509 = memref.load %arg1[%c82] : memref<96xi32, #tpu.memory_space<smem>>
    %510 = arith.index_cast %509 : i32 to index
    %c0_292 = arith.constant 0 : index
    %511 = vector.load %arg6[%510, %c0_292] : memref<40x64xf32, #tpu.memory_space<vmem>>, vector<1x64xf32>
    %c10_293 = arith.constant 10 : index
    %c0_294 = arith.constant 0 : index
    %512 = vector.load %arg8[%c10_293, %c0_294] : memref<24x64xf32, #tpu.memory_space<vmem>>, vector<1x64xf32>
    tpu.vector_store %arg8[%c10_293, %c0_294], %511 {strides = array<i32>} : memref<24x64xf32, #tpu.memory_space<vmem>>, vector<1x64xf32>,
    %c83 = arith.constant 83 : index
    %513 = memref.load %arg1[%c83] : memref<96xi32, #tpu.memory_space<smem>>
    %514 = arith.index_cast %513 : i32 to index
    %c0_295 = arith.constant 0 : index
    %515 = vector.load %arg6[%514, %c0_295] : memref<40x64xf32, #tpu.memory_space<vmem>>, vector<1x64xf32>
    %c11_296 = arith.constant 11 : index
    %c0_297 = arith.constant 0 : index
    %516 = vector.load %arg8[%c11_296, %c0_297] : memref<24x64xf32, #tpu.memory_space<vmem>>, vector<1x64xf32>
    tpu.vector_store %arg8[%c11_296, %c0_297], %515 {strides = array<i32>} : memref<24x64xf32, #tpu.memory_space<vmem>>, vector<1x64xf32>,
    %c84 = arith.constant 84 : index
    %517 = memref.load %arg1[%c84] : memref<96xi32, #tpu.memory_space<smem>>
    %518 = arith.index_cast %517 : i32 to index
    %c0_298 = arith.constant 0 : index
    %519 = vector.load %arg6[%518, %c0_298] : memref<40x64xf32, #tpu.memory_space<vmem>>, vector<1x64xf32>
    %c12_299 = arith.constant 12 : index
    %c0_300 = arith.constant 0 : index
    %520 = vector.load %arg8[%c12_299, %c0_300] : memref<24x64xf32, #tpu.memory_space<vmem>>, vector<1x64xf32>
    tpu.vector_store %arg8[%c12_299, %c0_300], %519 {strides = array<i32>} : memref<24x64xf32, #tpu.memory_space<vmem>>, vector<1x64xf32>,
    %c85 = arith.constant 85 : index
    %521 = memref.load %arg1[%c85] : memref<96xi32, #tpu.memory_space<smem>>
    %522 = arith.index_cast %521 : i32 to index
    %c0_301 = arith.constant 0 : index
    %523 = vector.load %arg6[%522, %c0_301] : memref<40x64xf32, #tpu.memory_space<vmem>>, vector<1x64xf32>
    %c13_302 = arith.constant 13 : index
    %c0_303 = arith.constant 0 : index
    %524 = vector.load %arg8[%c13_302, %c0_303] : memref<24x64xf32, #tpu.memory_space<vmem>>, vector<1x64xf32>
    tpu.vector_store %arg8[%c13_302, %c0_303], %523 {strides = array<i32>} : memref<24x64xf32, #tpu.memory_space<vmem>>, vector<1x64xf32>,
    %c86 = arith.constant 86 : index
    %525 = memref.load %arg1[%c86] : memref<96xi32, #tpu.memory_space<smem>>
    %526 = arith.index_cast %525 : i32 to index
    %c0_304 = arith.constant 0 : index
    %527 = vector.load %arg6[%526, %c0_304] : memref<40x64xf32, #tpu.memory_space<vmem>>, vector<1x64xf32>
    %c14_305 = arith.constant 14 : index
    %c0_306 = arith.constant 0 : index
    %528 = vector.load %arg8[%c14_305, %c0_306] : memref<24x64xf32, #tpu.memory_space<vmem>>, vector<1x64xf32>
    tpu.vector_store %arg8[%c14_305, %c0_306], %527 {strides = array<i32>} : memref<24x64xf32, #tpu.memory_space<vmem>>, vector<1x64xf32>,
    %c87 = arith.constant 87 : index
    %529 = memref.load %arg1[%c87] : memref<96xi32, #tpu.memory_space<smem>>
    %530 = arith.index_cast %529 : i32 to index
    %c0_307 = arith.constant 0 : index
    %531 = vector.load %arg6[%530, %c0_307] : memref<40x64xf32, #tpu.memory_space<vmem>>, vector<1x64xf32>
    %c15_308 = arith.constant 15 : index
    %c0_309 = arith.constant 0 : index
    %532 = vector.load %arg8[%c15_308, %c0_309] : memref<24x64xf32, #tpu.memory_space<vmem>>, vector<1x64xf32>
    tpu.vector_store %arg8[%c15_308, %c0_309], %531 {strides = array<i32>} : memref<24x64xf32, #tpu.memory_space<vmem>>, vector<1x64xf32>,
    %c88 = arith.constant 88 : index
    %533 = memref.load %arg1[%c88] : memref<96xi32, #tpu.memory_space<smem>>
    %534 = arith.index_cast %533 : i32 to index
    %c0_310 = arith.constant 0 : index
    %535 = vector.load %arg6[%534, %c0_310] : memref<40x64xf32, #tpu.memory_space<vmem>>, vector<1x64xf32>
    %c16_311 = arith.constant 16 : index
    %c0_312 = arith.constant 0 : index
    %536 = vector.load %arg8[%c16_311, %c0_312] : memref<24x64xf32, #tpu.memory_space<vmem>>, vector<1x64xf32>
    tpu.vector_store %arg8[%c16_311, %c0_312], %535 {strides = array<i32>} : memref<24x64xf32, #tpu.memory_space<vmem>>, vector<1x64xf32>,
    %c89 = arith.constant 89 : index
    %537 = memref.load %arg1[%c89] : memref<96xi32, #tpu.memory_space<smem>>
    %538 = arith.index_cast %537 : i32 to index
    %c0_313 = arith.constant 0 : index
    %539 = vector.load %arg6[%538, %c0_313] : memref<40x64xf32, #tpu.memory_space<vmem>>, vector<1x64xf32>
    %c17_314 = arith.constant 17 : index
    %c0_315 = arith.constant 0 : index
    %540 = vector.load %arg8[%c17_314, %c0_315] : memref<24x64xf32, #tpu.memory_space<vmem>>, vector<1x64xf32>
    tpu.vector_store %arg8[%c17_314, %c0_315], %539 {strides = array<i32>} : memref<24x64xf32, #tpu.memory_space<vmem>>, vector<1x64xf32>,
    %c90 = arith.constant 90 : index
    %541 = memref.load %arg1[%c90] : memref<96xi32, #tpu.memory_space<smem>>
    %542 = arith.index_cast %541 : i32 to index
    %c0_316 = arith.constant 0 : index
    %543 = vector.load %arg6[%542, %c0_316] : memref<40x64xf32, #tpu.memory_space<vmem>>, vector<1x64xf32>
    %c18_317 = arith.constant 18 : index
    %c0_318 = arith.constant 0 : index
    %544 = vector.load %arg8[%c18_317, %c0_318] : memref<24x64xf32, #tpu.memory_space<vmem>>, vector<1x64xf32>
    tpu.vector_store %arg8[%c18_317, %c0_318], %543 {strides = array<i32>} : memref<24x64xf32, #tpu.memory_space<vmem>>, vector<1x64xf32>,
    %c91 = arith.constant 91 : index
    %545 = memref.load %arg1[%c91] : memref<96xi32, #tpu.memory_space<smem>>
    %546 = arith.index_cast %545 : i32 to index
    %c0_319 = arith.constant 0 : index
    %547 = vector.load %arg6[%546, %c0_319] : memref<40x64xf32, #tpu.memory_space<vmem>>, vector<1x64xf32>
    %c19_320 = arith.constant 19 : index
    %c0_321 = arith.constant 0 : index
    %548 = vector.load %arg8[%c19_320, %c0_321] : memref<24x64xf32, #tpu.memory_space<vmem>>, vector<1x64xf32>
    tpu.vector_store %arg8[%c19_320, %c0_321], %547 {strides = array<i32>} : memref<24x64xf32, #tpu.memory_space<vmem>>, vector<1x64xf32>,
    %c92 = arith.constant 92 : index
    %549 = memref.load %arg1[%c92] : memref<96xi32, #tpu.memory_space<smem>>
    %550 = arith.index_cast %549 : i32 to index
    %c0_322 = arith.constant 0 : index
    %551 = vector.load %arg6[%550, %c0_322] : memref<40x64xf32, #tpu.memory_space<vmem>>, vector<1x64xf32>
    %c20_323 = arith.constant 20 : index
    %c0_324 = arith.constant 0 : index
    %552 = vector.load %arg8[%c20_323, %c0_324] : memref<24x64xf32, #tpu.memory_space<vmem>>, vector<1x64xf32>
    tpu.vector_store %arg8[%c20_323, %c0_324], %551 {strides = array<i32>} : memref<24x64xf32, #tpu.memory_space<vmem>>, vector<1x64xf32>,
    %c93 = arith.constant 93 : index
    %553 = memref.load %arg1[%c93] : memref<96xi32, #tpu.memory_space<smem>>
    %554 = arith.index_cast %553 : i32 to index
    %c0_325 = arith.constant 0 : index
    %555 = vector.load %arg6[%554, %c0_325] : memref<40x64xf32, #tpu.memory_space<vmem>>, vector<1x64xf32>
    %c21_326 = arith.constant 21 : index
    %c0_327 = arith.constant 0 : index
    %556 = vector.load %arg8[%c21_326, %c0_327] : memref<24x64xf32, #tpu.memory_space<vmem>>, vector<1x64xf32>
    tpu.vector_store %arg8[%c21_326, %c0_327], %555 {strides = array<i32>} : memref<24x64xf32, #tpu.memory_space<vmem>>, vector<1x64xf32>,
    %c94 = arith.constant 94 : index
    %557 = memref.load %arg1[%c94] : memref<96xi32, #tpu.memory_space<smem>>
    %558 = arith.index_cast %557 : i32 to index
    %c0_328 = arith.constant 0 : index
    %559 = vector.load %arg6[%558, %c0_328] : memref<40x64xf32, #tpu.memory_space<vmem>>, vector<1x64xf32>
    %c22_329 = arith.constant 22 : index
    %c0_330 = arith.constant 0 : index
    %560 = vector.load %arg8[%c22_329, %c0_330] : memref<24x64xf32, #tpu.memory_space<vmem>>, vector<1x64xf32>
    tpu.vector_store %arg8[%c22_329, %c0_330], %559 {strides = array<i32>} : memref<24x64xf32, #tpu.memory_space<vmem>>, vector<1x64xf32>,
    %c95 = arith.constant 95 : index
    %561 = memref.load %arg1[%c95] : memref<96xi32, #tpu.memory_space<smem>>
    %562 = arith.index_cast %561 : i32 to index
    %c0_331 = arith.constant 0 : index
    %563 = vector.load %arg6[%562, %c0_331] : memref<40x64xf32, #tpu.memory_space<vmem>>, vector<1x64xf32>
    %c23_332 = arith.constant 23 : index
    %c0_333 = arith.constant 0 : index
    %564 = vector.load %arg8[%c23_332, %c0_333] : memref<24x64xf32, #tpu.memory_space<vmem>>, vector<1x64xf32>
    tpu.vector_store %arg8[%c23_332, %c0_333], %563 {strides = array<i32>} : memref<24x64xf32, #tpu.memory_space<vmem>>, vector<1x64xf32>,
    %c0_334 = arith.constant 0 : index
    %c0_335 = arith.constant 0 : index
    %565 = vector.load %arg8[%c0_334, %c0_335] : memref<24x64xf32, #tpu.memory_space<vmem>>, vector<24x64xf32>
    %566 = vector.extract_strided_slice %565 {offsets = [0, 32], sizes = [24, 32], strides = [1, 1]} : vector<24x64xf32> to vector<24x32xf32>
    %cst_336 = arith.constant dense<0.000000e+00> : vector<24x128xf32>
    %567 = tpu.matmul %566, %9, %cst_336 {dimension_numbers = #tpu.dot_dimension_numbers<[1], [0], [0], [1], [0, 0, 1, 1], [], []>} : vector<24x32xf32>, vector<32x128xf32>, vector<24x128xf32> -> vector<24x128xf32>
    %c24_337 = arith.constant 24 : index
    %c0_338 = arith.constant 0 : index
    %568 = vector.load %arg7[%c24_337, %c0_338] : memref<32x128xf32, #tpu.memory_space<vmem>>, vector<8x128xf32>
    %569 = vector.extract_strided_slice %568 {offsets = [0, 96], sizes = [8, 32], strides = [1, 1]} : vector<8x128xf32> to vector<8x32xf32>
    %570 = vector.extract_strided_slice %567 {offsets = [0, 0], sizes = [8, 96], strides = [1, 1]} : vector<24x128xf32> to vector<8x96xf32>
    %571 = vector.extract_strided_slice %567 {offsets = [0, 96], sizes = [8, 32], strides = [1, 1]} : vector<24x128xf32> to vector<8x32xf32>
    %572 = arith.addf %571, %569 : vector<8x32xf32>
    %573 = arith.negf %572 : vector<8x32xf32>
    %574 = math.exp %573 : vector<8x32xf32>
    %cst_339 = arith.constant 1.000000e+00 : f32
    %575 = vector.broadcast %cst_339 : f32 to vector<8x32xf32>
    %576 = arith.addf %575, %574 : vector<8x32xf32>
    %577 = arith.divf %575, %576 : vector<8x32xf32>
    %578 = vector.extract_strided_slice %565 {offsets = [0, 0], sizes = [8, 32], strides = [1, 1]} : vector<24x64xf32> to vector<8x32xf32>
    %579 = arith.mulf %577, %578 : vector<8x32xf32>
    %580 = vector.extract_strided_slice %567 {offsets = [8, 0], sizes = [8, 96], strides = [1, 1]} : vector<24x128xf32> to vector<8x96xf32>
    %581 = arith.addf %570, %580 : vector<8x96xf32>
    %582 = vector.extract_strided_slice %567 {offsets = [8, 96], sizes = [8, 32], strides = [1, 1]} : vector<24x128xf32> to vector<8x32xf32>
    %583 = arith.addf %582, %569 : vector<8x32xf32>
    %584 = arith.negf %583 : vector<8x32xf32>
    %585 = math.exp %584 : vector<8x32xf32>
    %cst_340 = arith.constant 1.000000e+00 : f32
    %586 = vector.broadcast %cst_340 : f32 to vector<8x32xf32>
    %587 = arith.addf %586, %585 : vector<8x32xf32>
    %588 = arith.divf %586, %587 : vector<8x32xf32>
    %589 = vector.extract_strided_slice %565 {offsets = [8, 0], sizes = [8, 32], strides = [1, 1]} : vector<24x64xf32> to vector<8x32xf32>
    %590 = arith.mulf %588, %589 : vector<8x32xf32>
    %591 = arith.addf %579, %590 : vector<8x32xf32>
    %592 = vector.extract_strided_slice %567 {offsets = [16, 0], sizes = [8, 96], strides = [1, 1]} : vector<24x128xf32> to vector<8x96xf32>
    %593 = arith.addf %581, %592 : vector<8x96xf32>
    %594 = vector.extract_strided_slice %567 {offsets = [16, 96], sizes = [8, 32], strides = [1, 1]} : vector<24x128xf32> to vector<8x32xf32>
    %595 = arith.addf %594, %569 : vector<8x32xf32>
    %596 = arith.negf %595 : vector<8x32xf32>
    %597 = math.exp %596 : vector<8x32xf32>
    %cst_341 = arith.constant 1.000000e+00 : f32
    %598 = vector.broadcast %cst_341 : f32 to vector<8x32xf32>
    %599 = arith.addf %598, %597 : vector<8x32xf32>
    %600 = arith.divf %598, %599 : vector<8x32xf32>
    %601 = vector.extract_strided_slice %565 {offsets = [16, 0], sizes = [8, 32], strides = [1, 1]} : vector<24x64xf32> to vector<8x32xf32>
    %602 = arith.mulf %600, %601 : vector<8x32xf32>
    %603 = arith.addf %591, %602 : vector<8x32xf32>
    %604 = vector.extract_strided_slice %568 {offsets = [0, 0], sizes = [8, 96], strides = [1, 1]} : vector<8x128xf32> to vector<8x96xf32>
    %605 = arith.addf %604, %593 : vector<8x96xf32>
    %606 = vector.extract_strided_slice %605 {offsets = [0, 0], sizes = [8, 64], strides = [1, 1]} : vector<8x96xf32> to vector<8x64xf32>
    %607 = arith.negf %606 : vector<8x64xf32>
    %608 = math.exp %607 : vector<8x64xf32>
    %cst_342 = arith.constant 1.000000e+00 : f32
    %609 = vector.broadcast %cst_342 : f32 to vector<8x64xf32>
    %610 = arith.addf %609, %608 : vector<8x64xf32>
    %611 = arith.divf %609, %610 : vector<8x64xf32>
    %612 = vector.extract_strided_slice %611 {offsets = [0, 0], sizes = [8, 32], strides = [1, 1]} : vector<8x64xf32> to vector<8x32xf32>
    %613 = vector.extract_strided_slice %611 {offsets = [0, 32], sizes = [8, 32], strides = [1, 1]} : vector<8x64xf32> to vector<8x32xf32>
    %614 = vector.extract_strided_slice %605 {offsets = [0, 64], sizes = [8, 32], strides = [1, 1]} : vector<8x96xf32> to vector<8x32xf32>
    %615 = math.tanh %614 : vector<8x32xf32>
    %616 = arith.mulf %612, %615 : vector<8x32xf32>
    %617 = arith.addf %616, %603 : vector<8x32xf32>
    %618 = math.tanh %617 : vector<8x32xf32>
    %619 = arith.mulf %613, %618 : vector<8x32xf32>
    %620 = tpu.concatenate %617, %619 in 1 : vector<8x32xf32>, vector<8x32xf32> -> vector<8x64xf32>
    %c24_343 = arith.constant 24 : index
    %c0_344 = arith.constant 0 : index
    %621 = vector.load %arg6[%c24_343, %c0_344] : memref<40x64xf32, #tpu.memory_space<vmem>>, vector<8x64xf32>
    tpu.vector_store %arg6[%c24_343, %c0_344], %620 {strides = array<i32>} : memref<40x64xf32, #tpu.memory_space<vmem>>, vector<8x64xf32>,
    return
  }
  func.func @transform_0(%arg0: i32, %arg1: memref<96xi32, #tpu.memory_space<smem>>) -> (i32, i32) {
    %c0_i32 = arith.constant 0 : i32
    %c0_i32_0 = arith.constant 0 : i32
    %c0_i32_1 = arith.constant 0 : i32
    return %c0_i32, %c0_i32_0 : i32, i32
  }
  func.func @transform_1(%arg0: i32, %arg1: memref<96xi32, #tpu.memory_space<smem>>) -> (i32, i32) {
    %c0_i32 = arith.constant 0 : i32
    %c0_i32_0 = arith.constant 0 : i32
    %c0_i32_1 = arith.constant 0 : i32
    return %c0_i32, %c0_i32_0 : i32, i32
  }
  func.func @transform_2(%arg0: i32, %arg1: memref<96xi32, #tpu.memory_space<smem>>) -> (i32, i32) {
    %c0_i32 = arith.constant 0 : i32
    %c0_i32_0 = arith.constant 0 : i32
    %c0_i32_1 = arith.constant 0 : i32
    return %c0_i32, %c0_i32_0 : i32, i32
  }
  func.func @transform_3(%arg0: i32, %arg1: memref<96xi32, #tpu.memory_space<smem>>) -> (i32, i32) {
    %c0_i32 = arith.constant 0 : i32
    %c0_i32_0 = arith.constant 0 : i32
    %c0_i32_1 = arith.constant 0 : i32
    return %c0_i32, %c0_i32_0 : i32, i32
  }
  func.func @transform_4(%arg0: i32, %arg1: memref<96xi32, #tpu.memory_space<smem>>) -> (i32, i32) {
    %c0_i32 = arith.constant 0 : i32
    %c0_i32_0 = arith.constant 0 : i32
    %c0_i32_1 = arith.constant 0 : i32
    return %c0_i32, %c0_i32_0 : i32, i32
  }
}

</mosaic_0001>

<llo_original>
// kernel: tpu_custom_call.1
$region0: #{tpu_custom_call.1}
  #allocation0 [shape = 'u32[]', space=smem, size = 0x4, offset = 0x4, fixed_abs, tag = 'smem constant byte address 0x4 - core index']
  #allocation1 [shape = 'u32[144,128]{1,0:T(1,128)}', space=vmem, size = 0x12000, scoped, tag = 'internal scratch']
  #allocation2 [shape = 'f32[32,128]{1,0:T(8,128)}', space=vmem, size = 0x4000, scoped, tag = 'scratch operand']
  #allocation3 [shape = 'f32[24,64]{1,0:T(8,128)}', space=vmem, size = 0x3000, scoped, tag = 'scratch operand']
  #allocation4 [shape = 's32[1]{0}', space=sflag, size = 0x4, scoped, tag = 'scoped memory for tpu_custom_call.1']
  #allocation5 [shape = 'u8[512]{0}', space=smem, size = 0x200, scoped, tag = 'prefetched SMEM operand 0']
  %s0 = inlined_call_operand.hbm [shape: s32[96], index: 0, kind: input, shape index: {}]
  %s1 = inlined_call_operand.hbm [shape: f32[32,32], index: 1, kind: input, shape index: {}]
  %s2 = inlined_call_operand.hbm [shape: f32[32,128], index: 2, kind: input, shape index: {}]
  %s3 = inlined_call_operand.hbm [shape: f32[32,128], index: 3, kind: input, shape index: {}]
  %s4 = inlined_call_operand.vmem [shape: f32[1,128], index: 4, kind: input, shape index: {}]
  %s5 = inlined_call_operand.hbm [shape: f32[40,64], index: 5, kind: output, shape index: {}]
  %s6 = sld [smem:[#allocation0]]
  $region38: #{tpu_custom_call.1} parent=0
    _
  %s8 = ssub.s32 1, %s6
  %s9 = scalar_select 0, %s8, %s6
  %11 = dma.hbm_to_smem %s0, 16, [#allocation5], [#allocation4]
  %12 = dma.done [#allocation4], 16
  %13 = sfence
  $region1: #{tpu_custom_call.1} parent=0
    #allocation6 [shape = 'u8[16384]{0}', space=vmem, size = 0x4000, scoped, tag = 'input window, operand 1, single buffered']
    #allocation7 [shape = 's32[1]{0}', space=sflag, size = 0x4, scoped, tag = 'scoped memory for tpu_custom_call.1']
    #allocation8 [shape = 's32[1]{0}', space=sflag, size = 0x4, scoped, tag = 'scoped memory for tpu_custom_call.1']
    #allocation9 [shape = 'u8[16384]{0}', space=vmem, size = 0x4000, scoped, tag = 'input window, operand 2, single buffered']
    #allocation10 [shape = 's32[1]{0}', space=sflag, size = 0x4, scoped, tag = 'scoped memory for tpu_custom_call.1']
    #allocation11 [shape = 'u8[16384]{0}', space=vmem, size = 0x4000, scoped, tag = 'input window, operand 3, single buffered']
    #allocation12 [shape = 'u8[20480]{0}', space=vmem, size = 0x5000, scoped, tag = 'output window, operand 0, single buffered']
    %14 = vsyncpa [#allocation7], 0
    %15 = vsyncpa [#allocation10], 0
    %16 = vsyncpa [#allocation8], 0
    // Predicated region
    $region2: #{tpu_custom_call.1} parent=1 // pred_check
      _
    $region3: #{tpu_custom_call.1} parent=1 // pred_check_branch
      %18 = sbr.rel (0) target = $region5
    $region4: #{tpu_custom_call.1} parent=1 // pred_region
      %s20 = ssub.s32 512, 512
      %21 = vsyncadd [#allocation7], %s20
      %s22 = sshll.u32 [#allocation6], 4
      %s23 = int_to_ptr.vmem [resolvable:$true] %s22
      %28 = dma.hbm_to_vmem [thread:$0]  %s1, 512, %s23, [#allocation7], 128, 128, 8
    $region5: #{tpu_custom_call.1} parent=1 // pred_fallthru
      _
    // Predicated region
    $region6: #{tpu_custom_call.1} parent=1 // pred_check
      _
    $region7: #{tpu_custom_call.1} parent=1 // pred_check_branch
      %30 = sbr.rel (0) target = $region9
    $region8: #{tpu_custom_call.1} parent=1 // pred_region
      %s32 = ssub.s32 512, 512
      %33 = vsyncadd [#allocation10], %s32
      %s34 = sshll.u32 [#allocation9], 4
      %s35 = int_to_ptr.vmem [resolvable:$true] %s34
      %40 = dma.hbm_to_vmem [thread:$0]  %s2, 512, %s35, [#allocation10], 128, 128, 8
    $region9: #{tpu_custom_call.1} parent=1 // pred_fallthru
      _
    // Predicated region
    $region10: #{tpu_custom_call.1} parent=1 // pred_check
      _
    $region11: #{tpu_custom_call.1} parent=1 // pred_check_branch
      %42 = sbr.rel (0) target = $region13
    $region12: #{tpu_custom_call.1} parent=1 // pred_region
      %s44 = ssub.s32 512, 512
      %45 = vsyncadd [#allocation10], %s44
      %s46 = sshll.u32 [#allocation11], 4
      %s47 = int_to_ptr.vmem [resolvable:$true] %s46
      %52 = dma.hbm_to_vmem [thread:$0]  %s3, 512, %s47, [#allocation10], 128, 128, 8
    $region13: #{tpu_custom_call.1} parent=1 // pred_fallthru
      _
    // Predicated region
    $region14: #{tpu_custom_call.1} parent=1 // pred_check
      _
    $region15: #{tpu_custom_call.1} parent=1 // pred_check_branch
      %54 = sbr.rel (0) target = $region17
    $region16: #{tpu_custom_call.1} parent=1 // pred_region
      _
    $region17: #{tpu_custom_call.1} parent=1 // pred_fallthru
      _
    // Predicated region
    $region18: #{tpu_custom_call.1} parent=1 // pred_check
      _
    $region19: #{tpu_custom_call.1} parent=1 // pred_check_branch
      %56 = sbr.rel (0) target = $region21
    $region20: #{tpu_custom_call.1} parent=1 // pred_region
      %57 = dma.done [#allocation7], 512
    $region21: #{tpu_custom_call.1} parent=1 // pred_fallthru
      _
    // Predicated region
    $region22: #{tpu_custom_call.1} parent=1 // pred_check
      _
    $region23: #{tpu_custom_call.1} parent=1 // pred_check_branch
      %59 = sbr.rel (0) target = $region25
    $region24: #{tpu_custom_call.1} parent=1 // pred_region
      %60 = dma.done [#allocation10], 512
    $region25: #{tpu_custom_call.1} parent=1 // pred_fallthru
      _
    // Predicated region
    $region26: #{tpu_custom_call.1} parent=1 // pred_check
      _
    $region27: #{tpu_custom_call.1} parent=1 // pred_check_branch
      %62 = sbr.rel (0) target = $region29
    $region28: #{tpu_custom_call.1} parent=1 // pred_region
      %63 = dma.done [#allocation10], 512
    $region29: #{tpu_custom_call.1} parent=1 // pred_fallthru
      _
    %vm64 = vcmask 523264
    %65 = vst.msk [vmem:[#allocation12] sm:$0xff] %vm64, 0.0
    %66 = vst.msk [vmem:[#allocation12 + $0x8] sm:$0xff] %vm64, 0.0
    %67 = vst.msk [vmem:[#allocation12 + $0x10] sm:$0xff] %vm64, 0.0
    %68 = vst.msk [vmem:[#allocation12 + $0x18] sm:$0xff] %vm64, 0.0
    %69 = vst.msk [vmem:[#allocation12 + $0x20] sm:$0xff] %vm64, 0.0
    %v70 = vld [vmem:[#allocation6] sm:$0xff]
    %v71 = vld [vmem:[#allocation6 + $0x8] sm:$0xff]
    %v72 = vld [vmem:[#allocation6 + $0x10] sm:$0xff]
    %v73 = vld [vmem:[#allocation6 + $0x18] sm:$0xff]
    %v74 = vld [vmem:[#allocation9] sm:$0xff]
    %v75 = vld [vmem:[#allocation9 + $0x8] sm:$0xff]
    %v76 = vld [vmem:[#allocation9 + $0x10] sm:$0xff]
    %v77 = vld [vmem:[#allocation9 + $0x18] sm:$0xff]
    %v78 = vld [vmem:[%s4] sm:$0x1]
    %v80 = vlaneseq
    %v81 = vshrl.u32 %v80, 7
    %v82 = vsub.s32 0, %v81
    %v83 = vrot.slane %v78, %v82
    %vm85 = vcmask 261120
    %v87 = vsel %vm85, %v70, 0
    %v90 = vsel %vm85, %v71, 0
    %v93 = vsel %vm85, %v72, 0
    %v96 = vsel %vm85, %v73, 0
    %98 = vmatprep.subr.mxu0 0.0
    %99 = vmatpush1.msra.mxu0 %v74
    %100 = vmatprep.subr.mxu0 0.0
    %101 = vmatpush1.msra.mxu0 %v75
    %102 = vmatprep.subr.mxu0 0.0
    %103 = vmatpush1.msra.mxu0 %v76
    %104 = vmatprep.subr.mxu0 0.0
    %105 = vmatpush1.msra.mxu0 %v77
    %106 = vmatprep.subr.mxu0 0.0
    %107 = vmatpush1.msra.mxu0 0.0
    %108 = vmatprep.subr.mxu0 0.0
    %109 = vmatpush1.msra.mxu0 0.0
    %110 = vmatprep.subr.mxu0 0.0
    %111 = vmatpush1.msra.mxu0 0.0
    %112 = vmatprep.subr.mxu0 0.0
    %113 = vmatpush1.msra.mxu0 0.0
    %114 = vmatprep.subr.mxu0 0.0
    %115 = vmatpush1.msra.mxu0 0.0
    %116 = vmatprep.subr.mxu0 0.0
    %117 = vmatpush1.msra.mxu0 0.0
    %118 = vmatprep.subr.mxu0 0.0
    %119 = vmatpush1.msra.mxu0 0.0
    %120 = vmatprep.subr.mxu0 0.0
    %121 = vmatpush1.msra.mxu0 0.0
    %122 = vmatprep.subr.mxu0 0.0
    %123 = vmatpush1.msra.mxu0 0.0
    %124 = vmatprep.subr.mxu0 0.0
    %125 = vmatpush1.msra.mxu0 0.0
    %126 = vmatprep.subr.mxu0 0.0
    %127 = vmatpush1.msra.mxu0 0.0
    %128 = vmatprep.subr.mxu0 0.0
    %129 = vmatpush1.msra.mxu0 0.0
    %130 = vmatprep.subr.mxu0 0.0
    %131 = vmatpush1.msra.mxu0 0.0
    %132 = vmatprep.subr.mxu0 0.0
    %133 = vmatpush1.msra.mxu0 0.0
    %134 = vmatprep.subr.mxu0 0.0
    %135 = vmatpush1.msra.mxu0 0.0
    %136 = vmatprep.subr.mxu0 0.0
    %137 = vmatpush1.msra.mxu0 0.0
    %138 = vmatprep.subr.mxu0 0.0
    %139 = vmatpush1.msra.mxu0 0.0
    %140 = vmatprep.subr.mxu0 0.0
    %141 = vmatpush1.msra.mxu0 0.0
    %142 = vmatprep.subr.mxu0 0.0
    %143 = vmatpush1.msra.mxu0 0.0
    %144 = vmatprep.subr.mxu0 0.0
    %145 = vmatpush1.msra.mxu0 0.0
    %146 = vmatprep.subr.mxu0 0.0
    %147 = vmatpush1.msra.mxu0 0.0
    %148 = vmatprep.subr.mxu0 0.0
    %149 = vmatpush1.msra.mxu0 0.0
    %150 = vmatprep.subr.mxu0 0.0
    %151 = vmatpush1.msra.mxu0 0.0
    %152 = vmatprep.subr.mxu0 0.0
    %153 = vmatpush1.msra.mxu0 0.0
    %154 = vmatprep.subr.mxu0 0.0
    %155 = vmatpush1.msra.mxu0 0.0
    %156 = vmatprep.subr.mxu0 0.0
    %157 = vmatpush1.msra.mxu0 0.0
    %158 = vmatprep.subr.mxu0 0.0
    %159 = vmatpush1.msra.mxu0 0.0
    %160 = vmatprep.subr.mxu0 0.0
    %161 = vmatpush1.msra.mxu0 0.0
    %162 = vmatprep.mubr.f32.mxu0 0.0
    %163 = vmatmul.mubr.f32.gmra.mrb[0].mxu0 %v87
    %v164 = vpop.f32.mrb[0].mxu0
    %v165 = vadd.f32 %v83, %v164
    %v166 = vpop.f32.mrb[0].mxu0
    %167 = vmatprep.mubr.f32.mxu0 0.0
    %168 = vmatmul.mubr.f32.gmra.mrb[0].mxu0 %v90
    %v169 = vpop.f32.mrb[0].mxu0
    %v170 = vadd.f32 %v83, %v169
    %v171 = vpop.f32.mrb[0].mxu0
    %172 = vmatprep.mubr.f32.mxu0 0.0
    %173 = vmatmul.mubr.f32.gmra.mrb[0].mxu0 %v93
    %v174 = vpop.f32.mrb[0].mxu0
    %v175 = vadd.f32 %v83, %v174
    %v176 = vpop.f32.mrb[0].mxu0
    %177 = vmatprep.mubr.f32.mxu0 0.0
    %178 = vmatmul.mubr.f32.gmra.mrb[0].mxu0 %v96
    %v179 = vpop.f32.mrb[0].mxu0
    %v180 = vadd.f32 %v83, %v179
    %v181 = vpop.f32.mrb[0].mxu0
    %182 = vdwg.mxu0
    %183 = vst [vmem:[#allocation2] sm:$0xff] %v165
    %184 = vst [vmem:[#allocation2 + $0x8] sm:$0xff] %v170
    %185 = vst [vmem:[#allocation2 + $0x10] sm:$0xff] %v175
    %186 = vst [vmem:[#allocation2 + $0x18] sm:$0xff] %v180
    %v187 = vld [vmem:[#allocation11] sm:$0xff]
    %v188 = vld [vmem:[#allocation11 + $0x8] sm:$0xff]
    %v189 = vld [vmem:[#allocation11 + $0x10] sm:$0xff]
    %v190 = vld [vmem:[#allocation11 + $0x18] sm:$0xff]
    %s191 = sld [smem:[#allocation5]]
    %s192 = scalar_lea.vmem [#allocation12], %s191
    %v193 = vld [vmem:[%s192] sm:$0x1]
    %vm194 = vcmask 516096
    %195 = vst.msk [vmem:[#allocation3] sm:$0x1] %vm194, %v193
    %s196 = sld [smem:[#allocation5 + $0x1]]
    %s197 = scalar_lea.vmem [#allocation12], %s196
    %v198 = vld [vmem:[%s197] sm:$0x1]
    %199 = vst.msk [vmem:[#allocation3 + $0x1] sm:$0x1] %vm194, %v198
    %s200 = sld [smem:[#allocation5 + $0x2]]
    %s201 = scalar_lea.vmem [#allocation12], %s200
    %v202 = vld [vmem:[%s201] sm:$0x1]
    %203 = vst.msk [vmem:[#allocation3 + $0x2] sm:$0x1] %vm194, %v202
    %s204 = sld [smem:[#allocation5 + $0x3]]
    %s205 = scalar_lea.vmem [#allocation12], %s204
    %v206 = vld [vmem:[%s205] sm:$0x1]
    %207 = vst.msk [vmem:[#allocation3 + $0x3] sm:$0x1] %vm194, %v206
    %s208 = sld [smem:[#allocation5 + $0x4]]
    %s209 = scalar_lea.vmem [#allocation12], %s208
    %v210 = vld [vmem:[%s209] sm:$0x1]
    %211 = vst.msk [vmem:[#allocation3 + $0x4] sm:$0x1] %vm194, %v210
    %s212 = sld [smem:[#allocation5 + $0x5]]
    %s213 = scalar_lea.vmem [#allocation12], %s212
    %v214 = vld [vmem:[%s213] sm:$0x1]
    %215 = vst.msk [vmem:[#allocation3 + $0x5] sm:$0x1] %vm194, %v214
    %s216 = sld [smem:[#allocation5 + $0x6]]
    %s217 = scalar_lea.vmem [#allocation12], %s216
    %v218 = vld [vmem:[%s217] sm:$0x1]
    %219 = vst.msk [vmem:[#allocation3 + $0x6] sm:$0x1] %vm194, %v218
    %s220 = sld [smem:[#allocation5 + $0x7]]
    %s221 = scalar_lea.vmem [#allocation12], %s220
    %v222 = vld [vmem:[%s221] sm:$0x1]
    %223 = vst.msk [vmem:[#allocation3 + $0x7] sm:$0x1] %vm194, %v222
    %s224 = sld [smem:[#allocation5 + $0x8]]
    %s225 = scalar_lea.vmem [#allocation12], %s224
    %v226 = vld [vmem:[%s225] sm:$0x1]
    %227 = vst.msk [vmem:[#allocation3 + $0x8] sm:$0x1] %vm194, %v226
    %s228 = sld [smem:[#allocation5 + $0x9]]
    %s229 = scalar_lea.vmem [#allocation12], %s228
    %v230 = vld [vmem:[%s229] sm:$0x1]
    %231 = vst.msk [vmem:[#allocation3 + $0x9] sm:$0x1] %vm194, %v230
    %s232 = sld [smem:[#allocation5 + $0xa]]
    %s233 = scalar_lea.vmem [#allocation12], %s232
    %v234 = vld [vmem:[%s233] sm:$0x1]
    %235 = vst.msk [vmem:[#allocation3 + $0xa] sm:$0x1] %vm194, %v234
    %s236 = sld [smem:[#allocation5 + $0xb]]
    %s237 = scalar_lea.vmem [#allocation12], %s236
    %v238 = vld [vmem:[%s237] sm:$0x1]
    %239 = vst.msk [vmem:[#allocation3 + $0xb] sm:$0x1] %vm194, %v238
    %s240 = sld [smem:[#allocation5 + $0xc]]
    %s241 = scalar_lea.vmem [#allocation12], %s240
    %v242 = vld [vmem:[%s241] sm:$0x1]
    %243 = vst.msk [vmem:[#allocation3 + $0xc] sm:$0x1] %vm194, %v242
    %s244 = sld [smem:[#allocation5 + $0xd]]
    %s245 = scalar_lea.vmem [#allocation12], %s244
    %v246 = vld [vmem:[%s245] sm:$0x1]
    %247 = vst.msk [vmem:[#allocation3 + $0xd] sm:$0x1] %vm194, %v246
    %s248 = sld [smem:[#allocation5 + $0xe]]
    %s249 = scalar_lea.vmem [#allocation12], %s248
    %v250 = vld [vmem:[%s249] sm:$0x1]
    %251 = vst.msk [vmem:[#allocation3 + $0xe] sm:$0x1] %vm194, %v250
    %s252 = sld [smem:[#allocation5 + $0xf]]
    %s253 = scalar_lea.vmem [#allocation12], %s252
    %v254 = vld [vmem:[%s253] sm:$0x1]
    %255 = vst.msk [vmem:[#allocation3 + $0xf] sm:$0x1] %vm194, %v254
    %s256 = sld [smem:[#allocation5 + $0x10]]
    %s257 = scalar_lea.vmem [#allocation12], %s256
    %v258 = vld [vmem:[%s257] sm:$0x1]
    %259 = vst.msk [vmem:[#allocation3 + $0x10] sm:$0x1] %vm194, %v258
    %s260 = sld [smem:[#allocation5 + $0x11]]
    %s261 = scalar_lea.vmem [#allocation12], %s260
    %v262 = vld [vmem:[%s261] sm:$0x1]
    %263 = vst.msk [vmem:[#allocation3 + $0x11] sm:$0x1] %vm194, %v262
    %s264 = sld [smem:[#allocation5 + $0x12]]
    %s265 = scalar_lea.vmem [#allocation12], %s264
    %v266 = vld [vmem:[%s265] sm:$0x1]
    %267 = vst.msk [vmem:[#allocation3 + $0x12] sm:$0x1] %vm194, %v266
    %s268 = sld [smem:[#allocation5 + $0x13]]
    %s269 = scalar_lea.vmem [#allocation12], %s268
    %v270 = vld [vmem:[%s269] sm:$0x1]
    %271 = vst.msk [vmem:[#allocation3 + $0x13] sm:$0x1] %vm194, %v270
    %s272 = sld [smem:[#allocation5 + $0x14]]
    %s273 = scalar_lea.vmem [#allocation12], %s272
    %v274 = vld [vmem:[%s273] sm:$0x1]
    %275 = vst.msk [vmem:[#allocation3 + $0x14] sm:$0x1] %vm194, %v274
    %s276 = sld [smem:[#allocation5 + $0x15]]
    %s277 = scalar_lea.vmem [#allocation12], %s276
    %v278 = vld [vmem:[%s277] sm:$0x1]
    %279 = vst.msk [vmem:[#allocation3 + $0x15] sm:$0x1] %vm194, %v278
    %s280 = sld [smem:[#allocation5 + $0x16]]
    %s281 = scalar_lea.vmem [#allocation12], %s280
    %v282 = vld [vmem:[%s281] sm:$0x1]
    %283 = vst.msk [vmem:[#allocation3 + $0x16] sm:$0x1] %vm194, %v282
    %s284 = sld [smem:[#allocation5 + $0x17]]
    %s285 = scalar_lea.vmem [#allocation12], %s284
    %v286 = vld [vmem:[%s285] sm:$0x1]
    %287 = vst.msk [vmem:[#allocation3 + $0x17] sm:$0x1] %vm194, %v286
    %v288 = vld [vmem:[#allocation3] sm:$0xff]
    %v289 = vld [vmem:[#allocation3 + $0x8] sm:$0xff]
    %v290 = vld [vmem:[#allocation3 + $0x10] sm:$0xff]
    %294 = vrot.lane.b32.xlu0 %v288, 96
    %v295 = vpop.permute.xlu0 %294
    %296 = vrot.lane.b32.xlu0 %v289, 96
    %v297 = vpop.permute.xlu0 %296
    %298 = vrot.lane.b32.xlu0 %v290, 96
    %v299 = vpop.permute.xlu0 %298
    %v300 = vsel %vm85, %v295, 0
    %v302 = vsel %vm85, %v297, 0
    %v304 = vsel %vm85, %v299, 0
    %306 = vmatprep.subr.mxu0 0.0
    %307 = vmatpush1.msra.mxu0 %v187
    %308 = vmatprep.subr.mxu0 0.0
    %309 = vmatpush1.msra.mxu0 %v188
    %310 = vmatprep.subr.mxu0 0.0
    %311 = vmatpush1.msra.mxu0 %v189
    %312 = vmatprep.subr.mxu0 0.0
    %313 = vmatpush1.msra.mxu0 %v190
    %314 = vmatprep.subr.mxu0 0.0
    %315 = vmatpush1.msra.mxu0 0.0
    %316 = vmatprep.subr.mxu0 0.0
    %317 = vmatpush1.msra.mxu0 0.0
    %318 = vmatprep.subr.mxu0 0.0
    %319 = vmatpush1.msra.mxu0 0.0
    %320 = vmatprep.subr.mxu0 0.0
    %321 = vmatpush1.msra.mxu0 0.0
    %322 = vmatprep.subr.mxu0 0.0
    %323 = vmatpush1.msra.mxu0 0.0
    %324 = vmatprep.subr.mxu0 0.0
    %325 = vmatpush1.msra.mxu0 0.0
    %326 = vmatprep.subr.mxu0 0.0
    %327 = vmatpush1.msra.mxu0 0.0
    %328 = vmatprep.subr.mxu0 0.0
    %329 = vmatpush1.msra.mxu0 0.0
    %330 = vmatprep.subr.mxu0 0.0
    %331 = vmatpush1.msra.mxu0 0.0
    %332 = vmatprep.subr.mxu0 0.0
    %333 = vmatpush1.msra.mxu0 0.0
    %334 = vmatprep.subr.mxu0 0.0
    %335 = vmatpush1.msra.mxu0 0.0
    %336 = vmatprep.subr.mxu0 0.0
    %337 = vmatpush1.msra.mxu0 0.0
    %338 = vmatprep.subr.mxu0 0.0
    %339 = vmatpush1.msra.mxu0 0.0
    %340 = vmatprep.subr.mxu0 0.0
    %341 = vmatpush1.msra.mxu0 0.0
    %342 = vmatprep.subr.mxu0 0.0
    %343 = vmatpush1.msra.mxu0 0.0
    %344 = vmatprep.subr.mxu0 0.0
    %345 = vmatpush1.msra.mxu0 0.0
    %346 = vmatprep.subr.mxu0 0.0
    %347 = vmatpush1.msra.mxu0 0.0
    %348 = vmatprep.subr.mxu0 0.0
    %349 = vmatpush1.msra.mxu0 0.0
    %350 = vmatprep.subr.mxu0 0.0
    %351 = vmatpush1.msra.mxu0 0.0
    %352 = vmatprep.subr.mxu0 0.0
    %353 = vmatpush1.msra.mxu0 0.0
    %354 = vmatprep.subr.mxu0 0.0
    %355 = vmatpush1.msra.mxu0 0.0
    %356 = vmatprep.subr.mxu0 0.0
    %357 = vmatpush1.msra.mxu0 0.0
    %358 = vmatprep.subr.mxu0 0.0
    %359 = vmatpush1.msra.mxu0 0.0
    %360 = vmatprep.subr.mxu0 0.0
    %361 = vmatpush1.msra.mxu0 0.0
    %362 = vmatprep.subr.mxu0 0.0
    %363 = vmatpush1.msra.mxu0 0.0
    %364 = vmatprep.subr.mxu0 0.0
    %365 = vmatpush1.msra.mxu0 0.0
    %366 = vmatprep.subr.mxu0 0.0
    %367 = vmatpush1.msra.mxu0 0.0
    %368 = vmatprep.subr.mxu0 0.0
    %369 = vmatpush1.msra.mxu0 0.0
    %370 = vmatprep.mubr.f32.mxu0 0.0
    %371 = vmatmul.mubr.f32.gmra.mrb[0].mxu0 %v300
    %v372 = vpop.f32.mrb[0].mxu0
    %v373 = vadd.f32 0.0, %v372
    %v374 = vpop.f32.mrb[0].mxu0
    %375 = vmatprep.mubr.f32.mxu0 0.0
    %376 = vmatmul.mubr.f32.gmra.mrb[0].mxu0 %v302
    %v377 = vpop.f32.mrb[0].mxu0
    %v378 = vadd.f32 0.0, %v377
    %v379 = vpop.f32.mrb[0].mxu0
    %380 = vmatprep.mubr.f32.mxu0 0.0
    %381 = vmatmul.mubr.f32.gmra.mrb[0].mxu0 %v304
    %v382 = vpop.f32.mrb[0].mxu0
    %v383 = vadd.f32 0.0, %v382
    %v384 = vpop.f32.mrb[0].mxu0
    %385 = vdwg.mxu0
    %v386 = vld [vmem:[#allocation2] sm:$0xff]
    %v387 = vadd.f32 %v373, %v386
    %v388 = vxor.u32 %v387, 2147483648
    %v389 = vmul.f32 %v388, 1.442695
    %v390 = vpow.pop %v389
    %v391 = vadd.f32 %v390, 1.0
    %v392 = vrcp.pop %v391
    %v393 = vmul.f32 1.0, %v392
    %v395 = vmul.f32 %v393, %v295
    %v396 = vadd.f32 %v373, %v378
    %v397 = vadd.f32 %v378, %v386
    %v398 = vxor.u32 %v397, 2147483648
    %v399 = vmul.f32 %v398, 1.442695
    %v400 = vpow.pop %v399
    %v401 = vadd.f32 %v400, 1.0
    %v402 = vrcp.pop %v401
    %v403 = vmul.f32 1.0, %v402
    %v405 = vmul.f32 %v403, %v297
    %v406 = vadd.f32 %v395, %v405
    %v407 = vadd.f32 %v396, %v383
    %v408 = vadd.f32 %v383, %v386
    %v409 = vxor.u32 %v408, 2147483648
    %v410 = vmul.f32 %v409, 1.442695
    %v411 = vpow.pop %v410
    %v412 = vadd.f32 %v411, 1.0
    %v413 = vrcp.pop %v412
    %v414 = vmul.f32 1.0, %v413
    %v416 = vmul.f32 %v414, %v299
    %v417 = vadd.f32 %v406, %v416
    %v418 = vadd.f32 %v386, %v407
    %v419 = vxor.u32 %v418, 2147483648
    %v420 = vmul.f32 %v419, 1.442695
    %v421 = vpow.pop %v420
    %v422 = vadd.f32 %v421, 1.0
    %v423 = vrcp.pop %v422
    %v424 = vmul.f32 1.0, %v423
    %v425 = vtanh.pop %v418
    %427 = vrot.lane.b32.xlu0 %v425, 64
    %v428 = vpop.permute.xlu0 %427
    %v430 = vmul.f32 %v424, %v428
    %432 = vrot.lane.b32.xlu0 %v417, 32
    %v433 = vpop.permute.xlu0 %432
    %v435 = vadd.f32 %v430, %v433
    %v436 = vtanh.pop %v435
    %438 = vrot.lane.b32.xlu0 %v436, 32
    %v439 = vpop.permute.xlu0 %438
    %v441 = vmul.f32 %v424, %v439
    %v442 = vsel %vm85, %v435, %v441
    %443 = vst.msk [vmem:[#allocation12] sm:$0xff] %vm64, %v442
    %s444 = sld [smem:[#allocation5 + $0x18]]
    %s445 = scalar_lea.vmem [#allocation12], %s444
    %v446 = vld [vmem:[%s445] sm:$0x1]
    %447 = vst.msk [vmem:[#allocation3] sm:$0x1] %vm194, %v446
    %s448 = sld [smem:[#allocation5 + $0x19]]
    %s449 = scalar_lea.vmem [#allocation12], %s448
    %v450 = vld [vmem:[%s449] sm:$0x1]
    %451 = vst.msk [vmem:[#allocation3 + $0x1] sm:$0x1] %vm194, %v450
    %s452 = sld [smem:[#allocation5 + $0x1a]]
    %s453 = scalar_lea.vmem [#allocation12], %s452
    %v454 = vld [vmem:[%s453] sm:$0x1]
    %455 = vst.msk [vmem:[#allocation3 + $0x2] sm:$0x1] %vm194, %v454
    %s456 = sld [smem:[#allocation5 + $0x1b]]
    %s457 = scalar_lea.vmem [#allocation12], %s456
    %v458 = vld [vmem:[%s457] sm:$0x1]
    %459 = vst.msk [vmem:[#allocation3 + $0x3] sm:$0x1] %vm194, %v458
    %s460 = sld [smem:[#allocation5 + $0x1c]]
    %s461 = scalar_lea.vmem [#allocation12], %s460
    %v462 = vld [vmem:[%s461] sm:$0x1]
    %463 = vst.msk [vmem:[#allocation3 + $0x4] sm:$0x1] %vm194, %v462
    %s464 = sld [smem:[#allocation5 + $0x1d]]
    %s465 = scalar_lea.vmem [#allocation12], %s464
    %v466 = vld [vmem:[%s465] sm:$0x1]
    %467 = vst.msk [vmem:[#allocation3 + $0x5] sm:$0x1] %vm194, %v466
    %s468 = sld [smem:[#allocation5 + $0x1e]]
    %s469 = scalar_lea.vmem [#allocation12], %s468
    %v470 = vld [vmem:[%s469] sm:$0x1]
    %471 = vst.msk [vmem:[#allocation3 + $0x6] sm:$0x1] %vm194, %v470
    %s472 = sld [smem:[#allocation5 + $0x1f]]
    %s473 = scalar_lea.vmem [#allocation12], %s472
    %v474 = vld [vmem:[%s473] sm:$0x1]
    %475 = vst.msk [vmem:[#allocation3 + $0x7] sm:$0x1] %vm194, %v474
    %s476 = sld [smem:[#allocation5 + $0x20]]
    %s477 = scalar_lea.vmem [#allocation12], %s476
    %v478 = vld [vmem:[%s477] sm:$0x1]
    %479 = vst.msk [vmem:[#allocation3 + $0x8] sm:$0x1] %vm194, %v478
    %s480 = sld [smem:[#allocation5 + $0x21]]
    %s481 = scalar_lea.vmem [#allocation12], %s480
    %v482 = vld [vmem:[%s481] sm:$0x1]
    %483 = vst.msk [vmem:[#allocation3 + $0x9] sm:$0x1] %vm194, %v482
    %s484 = sld [smem:[#allocation5 + $0x22]]
    %s485 = scalar_lea.vmem [#allocation12], %s484
    %v486 = vld [vmem:[%s485] sm:$0x1]
    %487 = vst.msk [vmem:[#allocation3 + $0xa] sm:$0x1] %vm194, %v486
    %s488 = sld [smem:[#allocation5 + $0x23]]
    %s489 = scalar_lea.vmem [#allocation12], %s488
    %v490 = vld [vmem:[%s489] sm:$0x1]
    %491 = vst.msk [vmem:[#allocation3 + $0xb] sm:$0x1] %vm194, %v490
    %s492 = sld [smem:[#allocation5 + $0x24]]
    %s493 = scalar_lea.vmem [#allocation12], %s492
    %v494 = vld [vmem:[%s493] sm:$0x1]
    %495 = vst.msk [vmem:[#allocation3 + $0xc] sm:$0x1] %vm194, %v494
    %s496 = sld [smem:[#allocation5 + $0x25]]
    %s497 = scalar_lea.vmem [#allocation12], %s496
    %v498 = vld [vmem:[%s497] sm:$0x1]
    %499 = vst.msk [vmem:[#allocation3 + $0xd] sm:$0x1] %vm194, %v498
    %s500 = sld [smem:[#allocation5 + $0x26]]
    %s501 = scalar_lea.vmem [#allocation12], %s500
    %v502 = vld [vmem:[%s501] sm:$0x1]
    %503 = vst.msk [vmem:[#allocation3 + $0xe] sm:$0x1] %vm194, %v502
    %s504 = sld [smem:[#allocation5 + $0x27]]
    %s505 = scalar_lea.vmem [#allocation12], %s504
    %v506 = vld [vmem:[%s505] sm:$0x1]
    %507 = vst.msk [vmem:[#allocation3 + $0xf] sm:$0x1] %vm194, %v506
    %s508 = sld [smem:[#allocation5 + $0x28]]
    %s509 = scalar_lea.vmem [#allocation12], %s508
    %v510 = vld [vmem:[%s509] sm:$0x1]
    %511 = vst.msk [vmem:[#allocation3 + $0x10] sm:$0x1] %vm194, %v510
    %s512 = sld [smem:[#allocation5 + $0x29]]
    %s513 = scalar_lea.vmem [#allocation12], %s512
    %v514 = vld [vmem:[%s513] sm:$0x1]
    %515 = vst.msk [vmem:[#allocation3 + $0x11] sm:$0x1] %vm194, %v514
    %s516 = sld [smem:[#allocation5 + $0x2a]]
    %s517 = scalar_lea.vmem [#allocation12], %s516
    %v518 = vld [vmem:[%s517] sm:$0x1]
    %519 = vst.msk [vmem:[#allocation3 + $0x12] sm:$0x1] %vm194, %v518
    %s520 = sld [smem:[#allocation5 + $0x2b]]
    %s521 = scalar_lea.vmem [#allocation12], %s520
    %v522 = vld [vmem:[%s521] sm:$0x1]
    %523 = vst.msk [vmem:[#allocation3 + $0x13] sm:$0x1] %vm194, %v522
    %s524 = sld [smem:[#allocation5 + $0x2c]]
    %s525 = scalar_lea.vmem [#allocation12], %s524
    %v526 = vld [vmem:[%s525] sm:$0x1]
    %527 = vst.msk [vmem:[#allocation3 + $0x14] sm:$0x1] %vm194, %v526
    %s528 = sld [smem:[#allocation5 + $0x2d]]
    %s529 = scalar_lea.vmem [#allocation12], %s528
    %v530 = vld [vmem:[%s529] sm:$0x1]
    %531 = vst.msk [vmem:[#allocation3 + $0x15] sm:$0x1] %vm194, %v530
    %s532 = sld [smem:[#allocation5 + $0x2e]]
    %s533 = scalar_lea.vmem [#allocation12], %s532
    %v534 = vld [vmem:[%s533] sm:$0x1]
    %535 = vst.msk [vmem:[#allocation3 + $0x16] sm:$0x1] %vm194, %v534
    %s536 = sld [smem:[#allocation5 + $0x2f]]
    %s537 = scalar_lea.vmem [#allocation12], %s536
    %v538 = vld [vmem:[%s537] sm:$0x1]
    %539 = vst.msk [vmem:[#allocation3 + $0x17] sm:$0x1] %vm194, %v538
    %v540 = vld [vmem:[#allocation3] sm:$0xff]
    %v541 = vld [vmem:[#allocation3 + $0x8] sm:$0xff]
    %v542 = vld [vmem:[#allocation3 + $0x10] sm:$0xff]
    %546 = vrot.lane.b32.xlu0 %v540, 96
    %v547 = vpop.permute.xlu0 %546
    %548 = vrot.lane.b32.xlu0 %v541, 96
    %v549 = vpop.permute.xlu0 %548
    %550 = vrot.lane.b32.xlu0 %v542, 96
    %v551 = vpop.permute.xlu0 %550
    %v552 = vsel %vm85, %v547, 0
    %v554 = vsel %vm85, %v549, 0
    %v556 = vsel %vm85, %v551, 0
    %558 = vmatprep.subr.mxu0 0.0
    %559 = vmatpush1.msra.mxu0 %v187
    %560 = vmatprep.subr.mxu0 0.0
    %561 = vmatpush1.msra.mxu0 %v188
    %562 = vmatprep.subr.mxu0 0.0
    %563 = vmatpush1.msra.mxu0 %v189
    %564 = vmatprep.subr.mxu0 0.0
    %565 = vmatpush1.msra.mxu0 %v190
    %566 = vmatprep.subr.mxu0 0.0
    %567 = vmatpush1.msra.mxu0 0.0
    %568 = vmatprep.subr.mxu0 0.0
    %569 = vmatpush1.msra.mxu0 0.0
    %570 = vmatprep.subr.mxu0 0.0
    %571 = vmatpush1.msra.mxu0 0.0
    %572 = vmatprep.subr.mxu0 0.0
    %573 = vmatpush1.msra.mxu0 0.0
    %574 = vmatprep.subr.mxu0 0.0
    %575 = vmatpush1.msra.mxu0 0.0
    %576 = vmatprep.subr.mxu0 0.0
    %577 = vmatpush1.msra.mxu0 0.0
    %578 = vmatprep.subr.mxu0 0.0
    %579 = vmatpush1.msra.mxu0 0.0
    %580 = vmatprep.subr.mxu0 0.0
    %581 = vmatpush1.msra.mxu0 0.0
    %582 = vmatprep.subr.mxu0 0.0
    %583 = vmatpush1.msra.mxu0 0.0
    %584 = vmatprep.subr.mxu0 0.0
    %585 = vmatpush1.msra.mxu0 0.0
    %586 = vmatprep.subr.mxu0 0.0
    %587 = vmatpush1.msra.mxu0 0.0
    %588 = vmatprep.subr.mxu0 0.0
    %589 = vmatpush1.msra.mxu0 0.0
    %590 = vmatprep.subr.mxu0 0.0
    %591 = vmatpush1.msra.mxu0 0.0
    %592 = vmatprep.subr.mxu0 0.0
    %593 = vmatpush1.msra.mxu0 0.0
    %594 = vmatprep.subr.mxu0 0.0
    %595 = vmatpush1.msra.mxu0 0.0
    %596 = vmatprep.subr.mxu0 0.0
    %597 = vmatpush1.msra.mxu0 0.0
    %598 = vmatprep.subr.mxu0 0.0
    %599 = vmatpush1.msra.mxu0 0.0
    %600 = vmatprep.subr.mxu0 0.0
    %601 = vmatpush1.msra.mxu0 0.0
    %602 = vmatprep.subr.mxu0 0.0
    %603 = vmatpush1.msra.mxu0 0.0
    %604 = vmatprep.subr.mxu0 0.0
    %605 = vmatpush1.msra.mxu0 0.0
    %606 = vmatprep.subr.mxu0 0.0
    %607 = vmatpush1.msra.mxu0 0.0
    %608 = vmatprep.subr.mxu0 0.0
    %609 = vmatpush1.msra.mxu0 0.0
    %610 = vmatprep.subr.mxu0 0.0
    %611 = vmatpush1.msra.mxu0 0.0
    %612 = vmatprep.subr.mxu0 0.0
    %613 = vmatpush1.msra.mxu0 0.0
    %614 = vmatprep.subr.mxu0 0.0
    %615 = vmatpush1.msra.mxu0 0.0
    %616 = vmatprep.subr.mxu0 0.0
    %617 = vmatpush1.msra.mxu0 0.0
    %618 = vmatprep.subr.mxu0 0.0
    %619 = vmatpush1.msra.mxu0 0.0
    %620 = vmatprep.subr.mxu0 0.0
    %621 = vmatpush1.msra.mxu0 0.0
    %622 = vmatprep.mubr.f32.mxu0 0.0
    %623 = vmatmul.mubr.f32.gmra.mrb[0].mxu0 %v552
    %v624 = vpop.f32.mrb[0].mxu0
    %v625 = vadd.f32 0.0, %v624
    %v626 = vpop.f32.mrb[0].mxu0
    %627 = vmatprep.mubr.f32.mxu0 0.0
    %628 = vmatmul.mubr.f32.gmra.mrb[0].mxu0 %v554
    %v629 = vpop.f32.mrb[0].mxu0
    %v630 = vadd.f32 0.0, %v629
    %v631 = vpop.f32.mrb[0].mxu0
    %632 = vmatprep.mubr.f32.mxu0 0.0
    %633 = vmatmul.mubr.f32.gmra.mrb[0].mxu0 %v556
    %v634 = vpop.f32.mrb[0].mxu0
    %v635 = vadd.f32 0.0, %v634
    %v636 = vpop.f32.mrb[0].mxu0
    %637 = vdwg.mxu0
    %v638 = vld [vmem:[#allocation2 + $0x8] sm:$0xff]
    %v639 = vadd.f32 %v625, %v638
    %v640 = vxor.u32 %v639, 2147483648
    %v641 = vmul.f32 %v640, 1.442695
    %v642 = vpow.pop %v641
    %v643 = vadd.f32 %v642, 1.0
    %v644 = vrcp.pop %v643
    %v645 = vmul.f32 1.0, %v644
    %v647 = vmul.f32 %v645, %v547
    %v648 = vadd.f32 %v625, %v630
    %v649 = vadd.f32 %v630, %v638
    %v650 = vxor.u32 %v649, 2147483648
    %v651 = vmul.f32 %v650, 1.442695
    %v652 = vpow.pop %v651
    %v653 = vadd.f32 %v652, 1.0
    %v654 = vrcp.pop %v653
    %v655 = vmul.f32 1.0, %v654
    %v657 = vmul.f32 %v655, %v549
    %v658 = vadd.f32 %v647, %v657
    %v659 = vadd.f32 %v648, %v635
    %v660 = vadd.f32 %v635, %v638
    %v661 = vxor.u32 %v660, 2147483648
    %v662 = vmul.f32 %v661, 1.442695
    %v663 = vpow.pop %v662
    %v664 = vadd.f32 %v663, 1.0
    %v665 = vrcp.pop %v664
    %v666 = vmul.f32 1.0, %v665
    %v668 = vmul.f32 %v666, %v551
    %v669 = vadd.f32 %v658, %v668
    %v670 = vadd.f32 %v638, %v659
    %v671 = vxor.u32 %v670, 2147483648
    %v672 = vmul.f32 %v671, 1.442695
    %v673 = vpow.pop %v672
    %v674 = vadd.f32 %v673, 1.0
    %v675 = vrcp.pop %v674
    %v676 = vmul.f32 1.0, %v675
    %v677 = vtanh.pop %v670
    %679 = vrot.lane.b32.xlu0 %v677, 64
    %v680 = vpop.permute.xlu0 %679
    %v682 = vmul.f32 %v676, %v680
    %684 = vrot.lane.b32.xlu0 %v669, 32
    %v685 = vpop.permute.xlu0 %684
    %v687 = vadd.f32 %v682, %v685
    %v688 = vtanh.pop %v687
    %690 = vrot.lane.b32.xlu0 %v688, 32
    %v691 = vpop.permute.xlu0 %690
    %v693 = vmul.f32 %v676, %v691
    %v694 = vsel %vm85, %v687, %v693
    %695 = vst.msk [vmem:[#allocation12 + $0x8] sm:$0xff] %vm64, %v694
    %s696 = sld [smem:[#allocation5 + $0x30]]
    %s697 = scalar_lea.vmem [#allocation12], %s696
    %v698 = vld [vmem:[%s697] sm:$0x1]
    %699 = vst.msk [vmem:[#allocation3] sm:$0x1] %vm194, %v698
    %s700 = sld [smem:[#allocation5 + $0x31]]
    %s701 = scalar_lea.vmem [#allocation12], %s700
    %v702 = vld [vmem:[%s701] sm:$0x1]
    %703 = vst.msk [vmem:[#allocation3 + $0x1] sm:$0x1] %vm194, %v702
    %s704 = sld [smem:[#allocation5 + $0x32]]
    %s705 = scalar_lea.vmem [#allocation12], %s704
    %v706 = vld [vmem:[%s705] sm:$0x1]
    %707 = vst.msk [vmem:[#allocation3 + $0x2] sm:$0x1] %vm194, %v706
    %s708 = sld [smem:[#allocation5 + $0x33]]
    %s709 = scalar_lea.vmem [#allocation12], %s708
    %v710 = vld [vmem:[%s709] sm:$0x1]
    %711 = vst.msk [vmem:[#allocation3 + $0x3] sm:$0x1] %vm194, %v710
    %s712 = sld [smem:[#allocation5 + $0x34]]
    %s713 = scalar_lea.vmem [#allocation12], %s712
    %v714 = vld [vmem:[%s713] sm:$0x1]
    %715 = vst.msk [vmem:[#allocation3 + $0x4] sm:$0x1] %vm194, %v714
    %s716 = sld [smem:[#allocation5 + $0x35]]
    %s717 = scalar_lea.vmem [#allocation12], %s716
    %v718 = vld [vmem:[%s717] sm:$0x1]
    %719 = vst.msk [vmem:[#allocation3 + $0x5] sm:$0x1] %vm194, %v718
    %s720 = sld [smem:[#allocation5 + $0x36]]
    %s721 = scalar_lea.vmem [#allocation12], %s720
    %v722 = vld [vmem:[%s721] sm:$0x1]
    %723 = vst.msk [vmem:[#allocation3 + $0x6] sm:$0x1] %vm194, %v722
    %s724 = sld [smem:[#allocation5 + $0x37]]
    %s725 = scalar_lea.vmem [#allocation12], %s724
    %v726 = vld [vmem:[%s725] sm:$0x1]
    %727 = vst.msk [vmem:[#allocation3 + $0x7] sm:$0x1] %vm194, %v726
    %s728 = sld [smem:[#allocation5 + $0x38]]
    %s729 = scalar_lea.vmem [#allocation12], %s728
    %v730 = vld [vmem:[%s729] sm:$0x1]
    %731 = vst.msk [vmem:[#allocation3 + $0x8] sm:$0x1] %vm194, %v730
    %s732 = sld [smem:[#allocation5 + $0x39]]
    %s733 = scalar_lea.vmem [#allocation12], %s732
    %v734 = vld [vmem:[%s733] sm:$0x1]
    %735 = vst.msk [vmem:[#allocation3 + $0x9] sm:$0x1] %vm194, %v734
    %s736 = sld [smem:[#allocation5 + $0x3a]]
    %s737 = scalar_lea.vmem [#allocation12], %s736
    %v738 = vld [vmem:[%s737] sm:$0x1]
    %739 = vst.msk [vmem:[#allocation3 + $0xa] sm:$0x1] %vm194, %v738
    %s740 = sld [smem:[#allocation5 + $0x3b]]
    %s741 = scalar_lea.vmem [#allocation12], %s740
    %v742 = vld [vmem:[%s741] sm:$0x1]
    %743 = vst.msk [vmem:[#allocation3 + $0xb] sm:$0x1] %vm194, %v742
    %s744 = sld [smem:[#allocation5 + $0x3c]]
    %s745 = scalar_lea.vmem [#allocation12], %s744
    %v746 = vld [vmem:[%s745] sm:$0x1]
    %747 = vst.msk [vmem:[#allocation3 + $0xc] sm:$0x1] %vm194, %v746
    %s748 = sld [smem:[#allocation5 + $0x3d]]
    %s749 = scalar_lea.vmem [#allocation12], %s748
    %v750 = vld [vmem:[%s749] sm:$0x1]
    %751 = vst.msk [vmem:[#allocation3 + $0xd] sm:$0x1] %vm194, %v750
    %s752 = sld [smem:[#allocation5 + $0x3e]]
    %s753 = scalar_lea.vmem [#allocation12], %s752
    %v754 = vld [vmem:[%s753] sm:$0x1]
    %755 = vst.msk [vmem:[#allocation3 + $0xe] sm:$0x1] %vm194, %v754
    %s756 = sld [smem:[#allocation5 + $0x3f]]
    %s757 = scalar_lea.vmem [#allocation12], %s756
    %v758 = vld [vmem:[%s757] sm:$0x1]
    %759 = vst.msk [vmem:[#allocation3 + $0xf] sm:$0x1] %vm194, %v758
    %s760 = sld [smem:[#allocation5 + $0x40]]
    %s761 = scalar_lea.vmem [#allocation12], %s760
    %v762 = vld [vmem:[%s761] sm:$0x1]
    %763 = vst.msk [vmem:[#allocation3 + $0x10] sm:$0x1] %vm194, %v762
    %s764 = sld [smem:[#allocation5 + $0x41]]
    %s765 = scalar_lea.vmem [#allocation12], %s764
    %v766 = vld [vmem:[%s765] sm:$0x1]
    %767 = vst.msk [vmem:[#allocation3 + $0x11] sm:$0x1] %vm194, %v766
    %s768 = sld [smem:[#allocation5 + $0x42]]
    %s769 = scalar_lea.vmem [#allocation12], %s768
    %v770 = vld [vmem:[%s769] sm:$0x1]
    %771 = vst.msk [vmem:[#allocation3 + $0x12] sm:$0x1] %vm194, %v770
    %s772 = sld [smem:[#allocation5 + $0x43]]
    %s773 = scalar_lea.vmem [#allocation12], %s772
    %v774 = vld [vmem:[%s773] sm:$0x1]
    %775 = vst.msk [vmem:[#allocation3 + $0x13] sm:$0x1] %vm194, %v774
    %s776 = sld [smem:[#allocation5 + $0x44]]
    %s777 = scalar_lea.vmem [#allocation12], %s776
    %v778 = vld [vmem:[%s777] sm:$0x1]
    %779 = vst.msk [vmem:[#allocation3 + $0x14] sm:$0x1] %vm194, %v778
    %s780 = sld [smem:[#allocation5 + $0x45]]
    %s781 = scalar_lea.vmem [#allocation12], %s780
    %v782 = vld [vmem:[%s781] sm:$0x1]
    %783 = vst.msk [vmem:[#allocation3 + $0x15] sm:$0x1] %vm194, %v782
    %s784 = sld [smem:[#allocation5 + $0x46]]
    %s785 = scalar_lea.vmem [#allocation12], %s784
    %v786 = vld [vmem:[%s785] sm:$0x1]
    %787 = vst.msk [vmem:[#allocation3 + $0x16] sm:$0x1] %vm194, %v786
    %s788 = sld [smem:[#allocation5 + $0x47]]
    %s789 = scalar_lea.vmem [#allocation12], %s788
    %v790 = vld [vmem:[%s789] sm:$0x1]
    %791 = vst.msk [vmem:[#allocation3 + $0x17] sm:$0x1] %vm194, %v790
    %v792 = vld [vmem:[#allocation3] sm:$0xff]
    %v793 = vld [vmem:[#allocation3 + $0x8] sm:$0xff]
    %v794 = vld [vmem:[#allocation3 + $0x10] sm:$0xff]
    %798 = vrot.lane.b32.xlu0 %v792, 96
    %v799 = vpop.permute.xlu0 %798
    %800 = vrot.lane.b32.xlu0 %v793, 96
    %v801 = vpop.permute.xlu0 %800
    %802 = vrot.lane.b32.xlu0 %v794, 96
    %v803 = vpop.permute.xlu0 %802
    %v804 = vsel %vm85, %v799, 0
    %v806 = vsel %vm85, %v801, 0
    %v808 = vsel %vm85, %v803, 0
    %810 = vmatprep.subr.mxu0 0.0
    %811 = vmatpush1.msra.mxu0 %v187
    %812 = vmatprep.subr.mxu0 0.0
    %813 = vmatpush1.msra.mxu0 %v188
    %814 = vmatprep.subr.mxu0 0.0
    %815 = vmatpush1.msra.mxu0 %v189
    %816 = vmatprep.subr.mxu0 0.0
    %817 = vmatpush1.msra.mxu0 %v190
    %818 = vmatprep.subr.mxu0 0.0
    %819 = vmatpush1.msra.mxu0 0.0
    %820 = vmatprep.subr.mxu0 0.0
    %821 = vmatpush1.msra.mxu0 0.0
    %822 = vmatprep.subr.mxu0 0.0
    %823 = vmatpush1.msra.mxu0 0.0
    %824 = vmatprep.subr.mxu0 0.0
    %825 = vmatpush1.msra.mxu0 0.0
    %826 = vmatprep.subr.mxu0 0.0
    %827 = vmatpush1.msra.mxu0 0.0
    %828 = vmatprep.subr.mxu0 0.0
    %829 = vmatpush1.msra.mxu0 0.0
    %830 = vmatprep.subr.mxu0 0.0
    %831 = vmatpush1.msra.mxu0 0.0
    %832 = vmatprep.subr.mxu0 0.0
    %833 = vmatpush1.msra.mxu0 0.0
    %834 = vmatprep.subr.mxu0 0.0
    %835 = vmatpush1.msra.mxu0 0.0
    %836 = vmatprep.subr.mxu0 0.0
    %837 = vmatpush1.msra.mxu0 0.0
    %838 = vmatprep.subr.mxu0 0.0
    %839 = vmatpush1.msra.mxu0 0.0
    %840 = vmatprep.subr.mxu0 0.0
    %841 = vmatpush1.msra.mxu0 0.0
    %842 = vmatprep.subr.mxu0 0.0
    %843 = vmatpush1.msra.mxu0 0.0
    %844 = vmatprep.subr.mxu0 0.0
    %845 = vmatpush1.msra.mxu0 0.0
    %846 = vmatprep.subr.mxu0 0.0
    %847 = vmatpush1.msra.mxu0 0.0
    %848 = vmatprep.subr.mxu0 0.0
    %849 = vmatpush1.msra.mxu0 0.0
    %850 = vmatprep.subr.mxu0 0.0
    %851 = vmatpush1.msra.mxu0 0.0
    %852 = vmatprep.subr.mxu0 0.0
    %853 = vmatpush1.msra.mxu0 0.0
    %854 = vmatprep.subr.mxu0 0.0
    %855 = vmatpush1.msra.mxu0 0.0
    %856 = vmatprep.subr.mxu0 0.0
    %857 = vmatpush1.msra.mxu0 0.0
    %858 = vmatprep.subr.mxu0 0.0
    %859 = vmatpush1.msra.mxu0 0.0
    %860 = vmatprep.subr.mxu0 0.0
    %861 = vmatpush1.msra.mxu0 0.0
    %862 = vmatprep.subr.mxu0 0.0
    %863 = vmatpush1.msra.mxu0 0.0
    %864 = vmatprep.subr.mxu0 0.0
    %865 = vmatpush1.msra.mxu0 0.0
    %866 = vmatprep.subr.mxu0 0.0
    %867 = vmatpush1.msra.mxu0 0.0
    %868 = vmatprep.subr.mxu0 0.0
    %869 = vmatpush1.msra.mxu0 0.0
    %870 = vmatprep.subr.mxu0 0.0
    %871 = vmatpush1.msra.mxu0 0.0
    %872 = vmatprep.subr.mxu0 0.0
    %873 = vmatpush1.msra.mxu0 0.0
    %874 = vmatprep.mubr.f32.mxu0 0.0
    %875 = vmatmul.mubr.f32.gmra.mrb[0].mxu0 %v804
    %v876 = vpop.f32.mrb[0].mxu0
    %v877 = vadd.f32 0.0, %v876
    %v878 = vpop.f32.mrb[0].mxu0
    %879 = vmatprep.mubr.f32.mxu0 0.0
    %880 = vmatmul.mubr.f32.gmra.mrb[0].mxu0 %v806
    %v881 = vpop.f32.mrb[0].mxu0
    %v882 = vadd.f32 0.0, %v881
    %v883 = vpop.f32.mrb[0].mxu0
    %884 = vmatprep.mubr.f32.mxu0 0.0
    %885 = vmatmul.mubr.f32.gmra.mrb[0].mxu0 %v808
    %v886 = vpop.f32.mrb[0].mxu0
    %v887 = vadd.f32 0.0, %v886
    %v888 = vpop.f32.mrb[0].mxu0
    %889 = vdwg.mxu0
    %v890 = vld [vmem:[#allocation2 + $0x10] sm:$0xff]
    %v891 = vadd.f32 %v877, %v890
    %v892 = vxor.u32 %v891, 2147483648
    %v893 = vmul.f32 %v892, 1.442695
    %v894 = vpow.pop %v893
    %v895 = vadd.f32 %v894, 1.0
    %v896 = vrcp.pop %v895
    %v897 = vmul.f32 1.0, %v896
    %v899 = vmul.f32 %v897, %v799
    %v900 = vadd.f32 %v877, %v882
    %v901 = vadd.f32 %v882, %v890
    %v902 = vxor.u32 %v901, 2147483648
    %v903 = vmul.f32 %v902, 1.442695
    %v904 = vpow.pop %v903
    %v905 = vadd.f32 %v904, 1.0
    %v906 = vrcp.pop %v905
    %v907 = vmul.f32 1.0, %v906
    %v909 = vmul.f32 %v907, %v801
    %v910 = vadd.f32 %v899, %v909
    %v911 = vadd.f32 %v900, %v887
    %v912 = vadd.f32 %v887, %v890
    %v913 = vxor.u32 %v912, 2147483648
    %v914 = vmul.f32 %v913, 1.442695
    %v915 = vpow.pop %v914
    %v916 = vadd.f32 %v915, 1.0
    %v917 = vrcp.pop %v916
    %v918 = vmul.f32 1.0, %v917
    %v920 = vmul.f32 %v918, %v803
    %v921 = vadd.f32 %v910, %v920
    %v922 = vadd.f32 %v890, %v911
    %v923 = vxor.u32 %v922, 2147483648
    %v924 = vmul.f32 %v923, 1.442695
    %v925 = vpow.pop %v924
    %v926 = vadd.f32 %v925, 1.0
    %v927 = vrcp.pop %v926
    %v928 = vmul.f32 1.0, %v927
    %v929 = vtanh.pop %v922
    %931 = vrot.lane.b32.xlu0 %v929, 64
    %v932 = vpop.permute.xlu0 %931
    %v934 = vmul.f32 %v928, %v932
    %936 = vrot.lane.b32.xlu0 %v921, 32
    %v937 = vpop.permute.xlu0 %936
    %v939 = vadd.f32 %v934, %v937
    %v940 = vtanh.pop %v939
    %942 = vrot.lane.b32.xlu0 %v940, 32
    %v943 = vpop.permute.xlu0 %942
    %v945 = vmul.f32 %v928, %v943
    %v946 = vsel %vm85, %v939, %v945
    %947 = vst.msk [vmem:[#allocation12 + $0x10] sm:$0xff] %vm64, %v946
    %s948 = sld [smem:[#allocation5 + $0x48]]
    %s949 = scalar_lea.vmem [#allocation12], %s948
    %v950 = vld [vmem:[%s949] sm:$0x1]
    %951 = vst.msk [vmem:[#allocation3] sm:$0x1] %vm194, %v950
    %s952 = sld [smem:[#allocation5 + $0x49]]
    %s953 = scalar_lea.vmem [#allocation12], %s952
    %v954 = vld [vmem:[%s953] sm:$0x1]
    %955 = vst.msk [vmem:[#allocation3 + $0x1] sm:$0x1] %vm194, %v954
    %s956 = sld [smem:[#allocation5 + $0x4a]]
    %s957 = scalar_lea.vmem [#allocation12], %s956
    %v958 = vld [vmem:[%s957] sm:$0x1]
    %959 = vst.msk [vmem:[#allocation3 + $0x2] sm:$0x1] %vm194, %v958
    %s960 = sld [smem:[#allocation5 + $0x4b]]
    %s961 = scalar_lea.vmem [#allocation12], %s960
    %v962 = vld [vmem:[%s961] sm:$0x1]
    %963 = vst.msk [vmem:[#allocation3 + $0x3] sm:$0x1] %vm194, %v962
    %s964 = sld [smem:[#allocation5 + $0x4c]]
    %s965 = scalar_lea.vmem [#allocation12], %s964
    %v966 = vld [vmem:[%s965] sm:$0x1]
    %967 = vst.msk [vmem:[#allocation3 + $0x4] sm:$0x1] %vm194, %v966
    %s968 = sld [smem:[#allocation5 + $0x4d]]
    %s969 = scalar_lea.vmem [#allocation12], %s968
    %v970 = vld [vmem:[%s969] sm:$0x1]
    %971 = vst.msk [vmem:[#allocation3 + $0x5] sm:$0x1] %vm194, %v970
    %s972 = sld [smem:[#allocation5 + $0x4e]]
    %s973 = scalar_lea.vmem [#allocation12], %s972
    %v974 = vld [vmem:[%s973] sm:$0x1]
    %975 = vst.msk [vmem:[#allocation3 + $0x6] sm:$0x1] %vm194, %v974
    %s976 = sld [smem:[#allocation5 + $0x4f]]
    %s977 = scalar_lea.vmem [#allocation12], %s976
    %v978 = vld [vmem:[%s977] sm:$0x1]
    %979 = vst.msk [vmem:[#allocation3 + $0x7] sm:$0x1] %vm194, %v978
    %s980 = sld [smem:[#allocation5 + $0x50]]
    %s981 = scalar_lea.vmem [#allocation12], %s980
    %v982 = vld [vmem:[%s981] sm:$0x1]
    %983 = vst.msk [vmem:[#allocation3 + $0x8] sm:$0x1] %vm194, %v982
    %s984 = sld [smem:[#allocation5 + $0x51]]
    %s985 = scalar_lea.vmem [#allocation12], %s984
    %v986 = vld [vmem:[%s985] sm:$0x1]
    %987 = vst.msk [vmem:[#allocation3 + $0x9] sm:$0x1] %vm194, %v986
    %s988 = sld [smem:[#allocation5 + $0x52]]
    %s989 = scalar_lea.vmem [#allocation12], %s988
    %v990 = vld [vmem:[%s989] sm:$0x1]
    %991 = vst.msk [vmem:[#allocation3 + $0xa] sm:$0x1] %vm194, %v990
    %s992 = sld [smem:[#allocation5 + $0x53]]
    %s993 = scalar_lea.vmem [#allocation12], %s992
    %v994 = vld [vmem:[%s993] sm:$0x1]
    %995 = vst.msk [vmem:[#allocation3 + $0xb] sm:$0x1] %vm194, %v994
    %s996 = sld [smem:[#allocation5 + $0x54]]
    %s997 = scalar_lea.vmem [#allocation12], %s996
    %v998 = vld [vmem:[%s997] sm:$0x1]
    %999 = vst.msk [vmem:[#allocation3 + $0xc] sm:$0x1] %vm194, %v998
    %s1000 = sld [smem:[#allocation5 + $0x55]]
    %s1001 = scalar_lea.vmem [#allocation12], %s1000
    %v1002 = vld [vmem:[%s1001] sm:$0x1]
    %1003 = vst.msk [vmem:[#allocation3 + $0xd] sm:$0x1] %vm194, %v1002
    %s1004 = sld [smem:[#allocation5 + $0x56]]
    %s1005 = scalar_lea.vmem [#allocation12], %s1004
    %v1006 = vld [vmem:[%s1005] sm:$0x1]
    %1007 = vst.msk [vmem:[#allocation3 + $0xe] sm:$0x1] %vm194, %v1006
    %s1008 = sld [smem:[#allocation5 + $0x57]]
    %s1009 = scalar_lea.vmem [#allocation12], %s1008
    %v1010 = vld [vmem:[%s1009] sm:$0x1]
    %1011 = vst.msk [vmem:[#allocation3 + $0xf] sm:$0x1] %vm194, %v1010
    %s1012 = sld [smem:[#allocation5 + $0x58]]
    %s1013 = scalar_lea.vmem [#allocation12], %s1012
    %v1014 = vld [vmem:[%s1013] sm:$0x1]
    %1015 = vst.msk [vmem:[#allocation3 + $0x10] sm:$0x1] %vm194, %v1014
    %s1016 = sld [smem:[#allocation5 + $0x59]]
    %s1017 = scalar_lea.vmem [#allocation12], %s1016
    %v1018 = vld [vmem:[%s1017] sm:$0x1]
    %1019 = vst.msk [vmem:[#allocation3 + $0x11] sm:$0x1] %vm194, %v1018
    %s1020 = sld [smem:[#allocation5 + $0x5a]]
    %s1021 = scalar_lea.vmem [#allocation12], %s1020
    %v1022 = vld [vmem:[%s1021] sm:$0x1]
    %1023 = vst.msk [vmem:[#allocation3 + $0x12] sm:$0x1] %vm194, %v1022
    %s1024 = sld [smem:[#allocation5 + $0x5b]]
    %s1025 = scalar_lea.vmem [#allocation12], %s1024
    %v1026 = vld [vmem:[%s1025] sm:$0x1]
    %1027 = vst.msk [vmem:[#allocation3 + $0x13] sm:$0x1] %vm194, %v1026
    %s1028 = sld [smem:[#allocation5 + $0x5c]]
    %s1029 = scalar_lea.vmem [#allocation12], %s1028
    %v1030 = vld [vmem:[%s1029] sm:$0x1]
    %1031 = vst.msk [vmem:[#allocation3 + $0x14] sm:$0x1] %vm194, %v1030
    %s1032 = sld [smem:[#allocation5 + $0x5d]]
    %s1033 = scalar_lea.vmem [#allocation12], %s1032
    %v1034 = vld [vmem:[%s1033] sm:$0x1]
    %1035 = vst.msk [vmem:[#allocation3 + $0x15] sm:$0x1] %vm194, %v1034
    %s1036 = sld [smem:[#allocation5 + $0x5e]]
    %s1037 = scalar_lea.vmem [#allocation12], %s1036
    %v1038 = vld [vmem:[%s1037] sm:$0x1]
    %1039 = vst.msk [vmem:[#allocation3 + $0x16] sm:$0x1] %vm194, %v1038
    %s1040 = sld [smem:[#allocation5 + $0x5f]]
    %s1041 = scalar_lea.vmem [#allocation12], %s1040
    %v1042 = vld [vmem:[%s1041] sm:$0x1]
    %1043 = vst.msk [vmem:[#allocation3 + $0x17] sm:$0x1] %vm194, %v1042
    %v1044 = vld [vmem:[#allocation3] sm:$0xff]
    %v1045 = vld [vmem:[#allocation3 + $0x8] sm:$0xff]
    %v1046 = vld [vmem:[#allocation3 + $0x10] sm:$0xff]
    %1050 = vrot.lane.b32.xlu0 %v1044, 96
    %v1051 = vpop.permute.xlu0 %1050
    %1052 = vrot.lane.b32.xlu0 %v1045, 96
    %v1053 = vpop.permute.xlu0 %1052
    %1054 = vrot.lane.b32.xlu0 %v1046, 96
    %v1055 = vpop.permute.xlu0 %1054
    %v1056 = vsel %vm85, %v1051, 0
    %v1058 = vsel %vm85, %v1053, 0
    %v1060 = vsel %vm85, %v1055, 0
    %1062 = vmatprep.subr.mxu0 0.0
    %1063 = vmatpush1.msra.mxu0 %v187
    %1064 = vmatprep.subr.mxu0 0.0
    %1065 = vmatpush1.msra.mxu0 %v188
    %1066 = vmatprep.subr.mxu0 0.0
    %1067 = vmatpush1.msra.mxu0 %v189
    %1068 = vmatprep.subr.mxu0 0.0
    %1069 = vmatpush1.msra.mxu0 %v190
    %1070 = vmatprep.subr.mxu0 0.0
    %1071 = vmatpush1.msra.mxu0 0.0
    %1072 = vmatprep.subr.mxu0 0.0
    %1073 = vmatpush1.msra.mxu0 0.0
    %1074 = vmatprep.subr.mxu0 0.0
    %1075 = vmatpush1.msra.mxu0 0.0
    %1076 = vmatprep.subr.mxu0 0.0
    %1077 = vmatpush1.msra.mxu0 0.0
    %1078 = vmatprep.subr.mxu0 0.0
    %1079 = vmatpush1.msra.mxu0 0.0
    %1080 = vmatprep.subr.mxu0 0.0
    %1081 = vmatpush1.msra.mxu0 0.0
    %1082 = vmatprep.subr.mxu0 0.0
    %1083 = vmatpush1.msra.mxu0 0.0
    %1084 = vmatprep.subr.mxu0 0.0
    %1085 = vmatpush1.msra.mxu0 0.0
    %1086 = vmatprep.subr.mxu0 0.0
    %1087 = vmatpush1.msra.mxu0 0.0
    %1088 = vmatprep.subr.mxu0 0.0
    %1089 = vmatpush1.msra.mxu0 0.0
    %1090 = vmatprep.subr.mxu0 0.0
    %1091 = vmatpush1.msra.mxu0 0.0
    %1092 = vmatprep.subr.mxu0 0.0
    %1093 = vmatpush1.msra.mxu0 0.0
    %1094 = vmatprep.subr.mxu0 0.0
    %1095 = vmatpush1.msra.mxu0 0.0
    %1096 = vmatprep.subr.mxu0 0.0
    %1097 = vmatpush1.msra.mxu0 0.0
    %1098 = vmatprep.subr.mxu0 0.0
    %1099 = vmatpush1.msra.mxu0 0.0
    %1100 = vmatprep.subr.mxu0 0.0
    %1101 = vmatpush1.msra.mxu0 0.0
    %1102 = vmatprep.subr.mxu0 0.0
    %1103 = vmatpush1.msra.mxu0 0.0
    %1104 = vmatprep.subr.mxu0 0.0
    %1105 = vmatpush1.msra.mxu0 0.0
    %1106 = vmatprep.subr.mxu0 0.0
    %1107 = vmatpush1.msra.mxu0 0.0
    %1108 = vmatprep.subr.mxu0 0.0
    %1109 = vmatpush1.msra.mxu0 0.0
    %1110 = vmatprep.subr.mxu0 0.0
    %1111 = vmatpush1.msra.mxu0 0.0
    %1112 = vmatprep.subr.mxu0 0.0
    %1113 = vmatpush1.msra.mxu0 0.0
    %1114 = vmatprep.subr.mxu0 0.0
    %1115 = vmatpush1.msra.mxu0 0.0
    %1116 = vmatprep.subr.mxu0 0.0
    %1117 = vmatpush1.msra.mxu0 0.0
    %1118 = vmatprep.subr.mxu0 0.0
    %1119 = vmatpush1.msra.mxu0 0.0
    %1120 = vmatprep.subr.mxu0 0.0
    %1121 = vmatpush1.msra.mxu0 0.0
    %1122 = vmatprep.subr.mxu0 0.0
    %1123 = vmatpush1.msra.mxu0 0.0
    %1124 = vmatprep.subr.mxu0 0.0
    %1125 = vmatpush1.msra.mxu0 0.0
    %1126 = vmatprep.mubr.f32.mxu0 0.0
    %1127 = vmatmul.mubr.f32.gmra.mrb[0].mxu0 %v1056
    %v1128 = vpop.f32.mrb[0].mxu0
    %v1129 = vadd.f32 0.0, %v1128
    %v1130 = vpop.f32.mrb[0].mxu0
    %1131 = vmatprep.mubr.f32.mxu0 0.0
    %1132 = vmatmul.mubr.f32.gmra.mrb[0].mxu0 %v1058
    %v1133 = vpop.f32.mrb[0].mxu0
    %v1134 = vadd.f32 0.0, %v1133
    %v1135 = vpop.f32.mrb[0].mxu0
    %1136 = vmatprep.mubr.f32.mxu0 0.0
    %1137 = vmatmul.mubr.f32.gmra.mrb[0].mxu0 %v1060
    %v1138 = vpop.f32.mrb[0].mxu0
    %v1139 = vadd.f32 0.0, %v1138
    %v1140 = vpop.f32.mrb[0].mxu0
    %1141 = vdwg.mxu0
    %v1142 = vld [vmem:[#allocation2 + $0x18] sm:$0xff]
    %v1143 = vadd.f32 %v1129, %v1142
    %v1144 = vxor.u32 %v1143, 2147483648
    %v1145 = vmul.f32 %v1144, 1.442695
    %v1146 = vpow.pop %v1145
    %v1147 = vadd.f32 %v1146, 1.0
    %v1148 = vrcp.pop %v1147
    %v1149 = vmul.f32 1.0, %v1148
    %v1151 = vmul.f32 %v1149, %v1051
    %v1152 = vadd.f32 %v1129, %v1134
    %v1153 = vadd.f32 %v1134, %v1142
    %v1154 = vxor.u32 %v1153, 2147483648
    %v1155 = vmul.f32 %v1154, 1.442695
    %v1156 = vpow.pop %v1155
    %v1157 = vadd.f32 %v1156, 1.0
    %v1158 = vrcp.pop %v1157
    %v1159 = vmul.f32 1.0, %v1158
    %v1161 = vmul.f32 %v1159, %v1053
    %v1162 = vadd.f32 %v1151, %v1161
    %v1163 = vadd.f32 %v1152, %v1139
    %v1164 = vadd.f32 %v1139, %v1142
    %v1165 = vxor.u32 %v1164, 2147483648
    %v1166 = vmul.f32 %v1165, 1.442695
    %v1167 = vpow.pop %v1166
    %v1168 = vadd.f32 %v1167, 1.0
    %v1169 = vrcp.pop %v1168
    %v1170 = vmul.f32 1.0, %v1169
    %v1172 = vmul.f32 %v1170, %v1055
    %v1173 = vadd.f32 %v1162, %v1172
    %v1174 = vadd.f32 %v1142, %v1163
    %v1175 = vxor.u32 %v1174, 2147483648
    %v1176 = vmul.f32 %v1175, 1.442695
    %v1177 = vpow.pop %v1176
    %v1178 = vadd.f32 %v1177, 1.0
    %v1179 = vrcp.pop %v1178
    %v1180 = vmul.f32 1.0, %v1179
    %v1181 = vtanh.pop %v1174
    %1183 = vrot.lane.b32.xlu0 %v1181, 64
    %v1184 = vpop.permute.xlu0 %1183
    %v1186 = vmul.f32 %v1180, %v1184
    %1188 = vrot.lane.b32.xlu0 %v1173, 32
    %v1189 = vpop.permute.xlu0 %1188
    %v1191 = vadd.f32 %v1186, %v1189
    %v1192 = vtanh.pop %v1191
    %1194 = vrot.lane.b32.xlu0 %v1192, 32
    %v1195 = vpop.permute.xlu0 %1194
    %v1197 = vmul.f32 %v1180, %v1195
    %v1198 = vsel %vm85, %v1191, %v1197
    %1199 = vst.msk [vmem:[#allocation12 + $0x18] sm:$0xff] %vm64, %v1198
    // Predicated region
    $region30: #{tpu_custom_call.1} parent=1 // pred_check
      _
    $region31: #{tpu_custom_call.1} parent=1 // pred_check_branch
      %1201 = sbr.rel (0) target = $region33
    $region32: #{tpu_custom_call.1} parent=1 // pred_region
      %s1203 = ssub.s32 640, 640
      %1204 = vsyncadd [#allocation8], %s1203
      %s1205 = sshll.u32 [#allocation12], 4
      %s1206 = int_to_ptr.vmem [resolvable:$true] %s1205
      %1211 = dma.vmem_to_hbm [thread:$0]  %s1206, 640, %s5, [#allocation8], 128, 128, 8
    $region33: #{tpu_custom_call.1} parent=1 // pred_fallthru
      _
    // Predicated region
    $region34: #{tpu_custom_call.1} parent=1 // pred_check
      _
    $region35: #{tpu_custom_call.1} parent=1 // pred_check_branch
      %1213 = sbr.rel (0) target = $region37
    $region36: #{tpu_custom_call.1} parent=1 // pred_region
      %1214 = dma.done [#allocation8], 640
    $region37: #{tpu_custom_call.1} parent=1 // pred_fallthru
      _
    %1215 = vsyncpa [#allocation7], 1
    %1216 = vsyncpa [#allocation10], 1
    %1217 = vsyncpa [#allocation8], 1

</llo_original>
